<compile_context>
chip_gen: v7x
topology: tpu7x:2x2x1
jax: 0.10.0
libtpu: 0.0.40
codegen_flags: <defaults>
</compile_context>

<pallas_src>
import numpy as np
import jax
import jax.numpy as jnp
from jax.experimental import pallas as pl
from jax.experimental.pallas import tpu as pltpu

D_MODEL = 128
N_HEADS = 4
D_K = 32
D_V = 32
D_FF = 256
LN_EPS = 1e-5
BN_EPS = 1e-5


def _layer_norm(x, eps=LN_EPS):
    # One-pass statistics (var = E[x^2] - E[x]^2), clamped at 0 against
    # catastrophic cancellation.
    mu = jnp.mean(x, axis=-1, keepdims=True)
    ms = jnp.mean(x * x, axis=-1, keepdims=True)
    var = jnp.maximum(ms - mu * mu, 0.0)
    return (x - mu) * jax.lax.rsqrt(var + eps)


def _gelu_exact(x):
    # nn.GELU() default is the exact (erf) formulation
    return 0.5 * x * (1.0 + jax.lax.erf(x * np.float32(1.0 / np.sqrt(2.0))))


def encoder_layer_kernel(x_ref, mask_ref, wqkv_ref, wo_ref, w1_ref, w2_ref,
                         b2_ref, out_ref, attn_ref=None):
    BB, S, D = x_ref.shape
    x2 = x_ref[...].reshape(BB * S, D)                          # f32 residual
    xb = x2.astype(jnp.bfloat16)

    # ---- fused QKV projection: one bf16 MXU matmul with K=128, N=384 ----
    # (1/sqrt(d_k) is pre-folded into the Q columns of wqkv on the host.)
    qkv = jnp.dot(xb, wqkv_ref[...], preferred_element_type=jnp.float32)
    HD = N_HEADS * D_K
    q = qkv[:, :HD].astype(jnp.bfloat16).reshape(BB, S, HD)
    k = qkv[:, HD:2 * HD].astype(jnp.bfloat16).reshape(BB, S, HD)
    v = qkv[:, 2 * HD:3 * HD].astype(jnp.bfloat16).reshape(BB, S, HD)

    # boolean mask, hoisted out of the head loop (masked_fill semantics)
    mbool = mask_ref[...].astype(jnp.float32) > 0.0             # (BB, S, S)

    ctx_heads = []
    for h in range(N_HEADS):
        qh = q[:, :, h * D_K:(h + 1) * D_K]                      # (BB, S, D_K) bf16
        kh = k[:, :, h * D_K:(h + 1) * D_K]                      # (BB, S, D_K) bf16
        vh = v[:, :, h * D_V:(h + 1) * D_V]                      # (BB, S, D_V) bf16
        # NT matmul: no explicit K transpose needed.
        scores = jnp.einsum('bqd,bkd->bqk', qh, kh,
                            preferred_element_type=jnp.float32)  # (BB, S, S) f32
        scores = jnp.where(mbool, np.float32(-1.0e9), scores)
        m = jnp.max(scores, axis=-1, keepdims=True)
        e = jnp.exp(scores - m)
        attn = e / jnp.sum(e, axis=-1, keepdims=True)            # (BB, S, S) f32
        if attn_ref is not None:
            # direct per-head store (no stack / relayout of all heads)
            attn_ref[:, h:h + 1, :, :] = attn.reshape(BB, 1, S, S)
        ctx_heads.append(jnp.einsum('bqk,bkd->bqd', attn.astype(jnp.bfloat16),
                                    vh, preferred_element_type=jnp.float32))

    # concatenate heads in registers -> single K = H*D_V = 128 output projection
    ctx = jnp.concatenate(ctx_heads, axis=-1).reshape(BB * S, N_HEADS * D_V)
    attn_out = jnp.dot(ctx.astype(jnp.bfloat16), wo_ref[...],
                       preferred_element_type=jnp.float32)

    # Add & Norm (attention block)
    h1 = _layer_norm(attn_out + x2)                              # (BB*S, D)

    # Position-wise FFN; eval-mode BatchNorm folded into w2/b2, Dropout = identity.
    ff = _gelu_exact(jnp.dot(h1.astype(jnp.bfloat16), w1_ref[...],
                             preferred_element_type=jnp.float32))
    out2 = jnp.dot(ff.astype(jnp.bfloat16), w2_ref[...],
                   preferred_element_type=jnp.float32) + b2_ref[...]

    # Add & Norm (FFN block)
    out_ref[...] = _layer_norm(out2 + h1).reshape(BB, S, D)


def _pick_b_blk(B, S, want_attn=True, max_rows=512,
                vmem_budget=32 * 1024 * 1024):
    """Largest divisor of B such that
       * b_blk*S rows keep the MXU M dimension fat but bounded (<= max_rows),
       * double-buffered pipeline blocks fit a v7x-safe VMEM budget,
       * b_blk <= B//2 so the 'parallel' batch axis has >=2 steps (v7x megacore)."""
    cap = max(1, B // 2)
    best = 1
    for cand in range(1, cap + 1):
        if B % cand:
            continue
        rows = cand * S
        if rows > max_rows:
            continue
        x_b = rows * D_MODEL * 4                 # f32 input block
        m_b = cand * S * S * 1                   # int8 mask block
        o_b = rows * D_MODEL * 4                 # f32 output block
        a_b = cand * N_HEADS * S * S * 4 if want_attn else 0
        if 2 * (x_b + m_b + o_b + a_b) <= vmem_budget:  # x2 for double-buffering
            best = cand
    return best


def encoder_layer(x, mask, params, b_blk=None, return_attn=True):
    B, S, D = x.shape
    wq, wk, wv, wo, w1, w2, bng, bnb, bnm, bnv = params

    # ---- wrapper-side (one-time) parameter preprocessing ----
    scale = np.float32(1.0 / np.sqrt(D_K))
    wqkv = jnp.concatenate([wq * scale, wk, wv], axis=1)          # scale folded into Q
    inv = jax.lax.rsqrt(bnv + BN_EPS)                             # (1, D_FF)
    w2_eff = (bng * inv).reshape(D_FF, 1) * w2                    # BN scale into W2
    b2_eff = ((bnb - bnm * bng * inv) @ w2).reshape(1, D)         # BN shift into bias

    wqkv_bf = wqkv.astype(jnp.bfloat16)
    wo_bf = wo.astype(jnp.bfloat16)
    w1_bf = w1.astype(jnp.bfloat16)
    w2_bf = w2_eff.astype(jnp.bfloat16)
    b2_f32 = b2_eff.astype(jnp.float32)
    mask_i8 = (mask != 0).astype(jnp.int8)                        # 4x less DMA than int32

    if b_blk is None:
        b_blk = _pick_b_blk(B, S, want_attn=return_attn)
    assert B % b_blk == 0, "b_blk must divide batch size"
    grid = (B // b_blk,)

    def full_spec(arr):
        n = arr.ndim
        return pl.BlockSpec(arr.shape, lambda b, n=n: (0,) * n)

    out_shapes = [jax.ShapeDtypeStruct((B, S, D), jnp.float32)]
    out_specs = [pl.BlockSpec((b_blk, S, D), lambda b: (b, 0, 0))]
    if return_attn:
        out_shapes.append(jax.ShapeDtypeStruct((B, N_HEADS, S, S), jnp.float32))
        out_specs.append(pl.BlockSpec((b_blk, N_HEADS, S, S),
                                      lambda b: (b, 0, 0, 0)))

    result = pl.pallas_call(
        encoder_layer_kernel,
        out_shape=tuple(out_shapes),
        grid=grid,
        in_specs=[
            pl.BlockSpec((b_blk, S, D), lambda b: (b, 0, 0)),     # enc_inputs
            pl.BlockSpec((b_blk, S, S), lambda b: (b, 0, 0)),     # attn mask (int8)
            full_spec(wqkv_bf), full_spec(wo_bf), full_spec(w1_bf),
            full_spec(w2_bf), full_spec(b2_f32),
        ],
        out_specs=tuple(out_specs),
        compiler_params=pltpu.CompilerParams(
            dimension_semantics=("parallel",),
            vmem_limit_bytes=64 * 1024 * 1024),
    )(x, mask_i8, wqkv_bf, wo_bf, w1_bf, w2_bf, b2_f32)

    if return_attn:
        return result[0], result[1]
    return result[0]


def reference(x, mask, params):
    """Pure-JAX (f32) mirror of the PyTorch forward (eval mode) for verification."""
    wq, wk, wv, wo, w1, w2, bng, bnb, bnm, bnv = params
    B, S, D = x.shape
    q = (x @ wq).reshape(B, S, N_HEADS, D_K).transpose(0, 2, 1, 3)
    k = (x @ wk).reshape(B, S, N_HEADS, D_K).transpose(0, 2, 1, 3)
    v = (x @ wv).reshape(B, S, N_HEADS, D_V).transpose(0, 2, 1, 3)
    scores = jnp.einsum("bhqd,bhkd->bhqk", q, k) / np.sqrt(D_K)
    scores = jnp.where((mask > 0)[:, None, :, :], -1.0e9, scores)
    attn = jax.nn.softmax(scores, axis=-1)
    ctx = jnp.einsum("bhqk,bhkd->bhqd", attn, v).transpose(0, 2, 1, 3)
    ctx = ctx.reshape(B, S, N_HEADS * D_V)

    def ln(t):
        mu = jnp.mean(t, axis=-1, keepdims=True)
        var = jnp.mean((t - mu) ** 2, axis=-1, keepdims=True)
        return (t - mu) * jax.lax.rsqrt(var + LN_EPS)

    h1 = ln(ctx @ wo + x)
    ff = _gelu_exact(h1 @ w1)
    bn = (ff - bnm) * jax.lax.rsqrt(bnv + BN_EPS) * bng + bnb
    out = ln(bn @ w2 + h1)
    return out, attn


if __name__ == "__main__":
    B, S = 2, 8
    key = jax.random.PRNGKey(0)
    ks = jax.random.split(key, 8)

    x = jax.random.normal(ks[0], (B, S, D_MODEL), jnp.float32)
    # deterministic padding-style mask: last two key positions masked
    mask = jnp.zeros((B, S, S), jnp.int32).at[:, :, S - 2:].set(1)

    scale = 0.05
    wq = scale * jax.random.normal(ks[1], (D_MODEL, N_HEADS * D_K), jnp.float32)
    wk = scale * jax.random.normal(ks[2], (D_MODEL, N_HEADS * D_K), jnp.float32)
    wv = scale * jax.random.normal(ks[3], (D_MODEL, N_HEADS * D_V), jnp.float32)
    wo = scale * jax.random.normal(ks[4], (N_HEADS * D_V, D_MODEL), jnp.float32)
    w1 = scale * jax.random.normal(ks[5], (D_MODEL, D_FF), jnp.float32)
    w2 = scale * jax.random.normal(ks[6], (D_FF, D_MODEL), jnp.float32)
    bng = jnp.ones((1, D_FF), jnp.float32)     # BatchNorm1d weight
    bnb = jnp.zeros((1, D_FF), jnp.float32)    # BatchNorm1d bias
    bnm = jnp.zeros((1, D_FF), jnp.float32)    # running_mean
    bnv = jnp.ones((1, D_FF), jnp.float32)     # running_var
    params = (wq, wk, wv, wo, w1, w2, bng, bnb, bnm, bnv)

    # full path (attention weights returned)
    out, attn = encoder_layer(x, mask, params, return_attn=True)
    jax.block_until_ready((out, attn))

    # weights-free path (optional attn output disabled)
    out_noattn = encoder_layer(x, mask, params, return_attn=False)
    jax.block_until_ready(out_noattn)

    ref_out, ref_attn = reference(x, mask, params)
    assert out.shape == (B, S, D_MODEL) and attn.shape == (B, N_HEADS, S, S)
    # bf16 MXU operands -> tolerances loosened vs. the pure-f32 reference
    assert jnp.allclose(out, ref_out, atol=3e-2, rtol=3e-2), "enc_outputs mismatch"
    assert jnp.allclose(out_noattn, ref_out, atol=3e-2, rtol=3e-2), "no-attn path mismatch"
    assert jnp.allclose(attn, ref_attn, atol=1e-2, rtol=1e-2), "attn mismatch"
    print("KERNEL_OK")
</pallas_src>

<mosaic_0001>
module attributes {stable_mosaic.version = 11 : i64} {
  func.func @encoder_layer_kernel(%arg0: i32, %arg1: memref<1x8x128xf32, #tpu.memory_space<vmem>>, %arg2: memref<1x8x8xi8, #tpu.memory_space<vmem>>, %arg3: memref<128x384xbf16, #tpu.memory_space<vmem>>, %arg4: memref<128x128xbf16, #tpu.memory_space<vmem>>, %arg5: memref<128x256xbf16, #tpu.memory_space<vmem>>, %arg6: memref<256x128xbf16, #tpu.memory_space<vmem>>, %arg7: memref<1x128xf32, #tpu.memory_space<vmem>>, %arg8: memref<1x8x128xf32, #tpu.memory_space<vmem>>, %arg9: memref<1x4x8x8xf32, #tpu.memory_space<vmem>>) attributes {dimension_semantics = [#tpu.dimension_semantics<parallel>], iteration_bounds = array<i64: 2>, scalar_prefetch = 0 : i64, scratch_operands = 0 : i64, tpu.core_type = #tpu.core_type<tc>, window_params = [{transform_indices = @transform_0, window_bounds = array<i64: 1, 8, 128>}, {transform_indices = @transform_1, window_bounds = array<i64: 1, 8, 8>}, {pipeline_mode = #tpu.pipeline_mode<synchronous>, transform_indices = @transform_2, window_bounds = array<i64: 128, 384>}, {pipeline_mode = #tpu.pipeline_mode<synchronous>, transform_indices = @transform_3, window_bounds = array<i64: 128, 128>}, {pipeline_mode = #tpu.pipeline_mode<synchronous>, transform_indices = @transform_4, window_bounds = array<i64: 128, 256>}, {pipeline_mode = #tpu.pipeline_mode<synchronous>, transform_indices = @transform_5, window_bounds = array<i64: 256, 128>}, {pipeline_mode = #tpu.pipeline_mode<synchronous>, transform_indices = @transform_6, window_bounds = array<i64: 1, 128>}, {transform_indices = @transform_7, window_bounds = array<i64: 1, 8, 128>}, {transform_indices = @transform_8, window_bounds = array<i64: 1, 4, 8, 8>}]} {
    %c0 = arith.constant 0 : index
    %c0_0 = arith.constant 0 : index
    %c0_1 = arith.constant 0 : index
    %0 = vector.load %arg1[%c0, %c0_0, %c0_1] : memref<1x8x128xf32, #tpu.memory_space<vmem>>, vector<1x8x128xf32>
    %1 = vector.shape_cast %0 : vector<1x8x128xf32> to vector<8x128xf32>
    %2 = arith.truncf %1 : vector<8x128xf32> to vector<8x128xbf16>
    %c0_2 = arith.constant 0 : index
    %c0_3 = arith.constant 0 : index
    %3 = vector.load %arg3[%c0_2, %c0_3] : memref<128x384xbf16, #tpu.memory_space<vmem>>, vector<128x384xbf16>
    %cst = arith.constant dense<0.000000e+00> : vector<8x384xf32>
    %4 = tpu.matmul %2, %3, %cst {dimension_numbers = #tpu.dot_dimension_numbers<[1], [0], [0], [1], [0, 0, 1, 1], [], []>} : vector<8x128xbf16>, vector<128x384xbf16>, vector<8x384xf32> -> vector<8x384xf32>
    %5 = vector.extract_strided_slice %4 {offsets = [0, 0], sizes = [8, 128], strides = [1, 1]} : vector<8x384xf32> to vector<8x128xf32>
    %6 = arith.truncf %5 : vector<8x128xf32> to vector<8x128xbf16>
    %7 = vector.shape_cast %6 : vector<8x128xbf16> to vector<1x8x128xbf16>
    %8 = vector.extract_strided_slice %4 {offsets = [0, 128], sizes = [8, 128], strides = [1, 1]} : vector<8x384xf32> to vector<8x128xf32>
    %9 = arith.truncf %8 : vector<8x128xf32> to vector<8x128xbf16>
    %10 = vector.shape_cast %9 : vector<8x128xbf16> to vector<1x8x128xbf16>
    %11 = vector.extract_strided_slice %4 {offsets = [0, 256], sizes = [8, 128], strides = [1, 1]} : vector<8x384xf32> to vector<8x128xf32>
    %12 = arith.truncf %11 : vector<8x128xf32> to vector<8x128xbf16>
    %13 = vector.shape_cast %12 : vector<8x128xbf16> to vector<1x8x128xbf16>
    %c0_4 = arith.constant 0 : index
    %c0_5 = arith.constant 0 : index
    %c0_6 = arith.constant 0 : index
    %14 = vector.load %arg2[%c0_4, %c0_5, %c0_6] : memref<1x8x8xi8, #tpu.memory_space<vmem>>, vector<1x8x8xi8>
    %15 = arith.sitofp %14 : vector<1x8x8xi8> to vector<1x8x8xf32>
    %cst_7 = arith.constant 0.000000e+00 : f32
    %16 = vector.broadcast %cst_7 : f32 to vector<1x8x8xf32>
    %17 = arith.cmpf ogt, %15, %16 : vector<1x8x8xf32>
    %18 = vector.extract_strided_slice %7 {offsets = [0, 0, 0], sizes = [1, 8, 32], strides = [1, 1, 1]} : vector<1x8x128xbf16> to vector<1x8x32xbf16>
    %19 = vector.extract_strided_slice %10 {offsets = [0, 0, 0], sizes = [1, 8, 32], strides = [1, 1, 1]} : vector<1x8x128xbf16> to vector<1x8x32xbf16>
    %20 = vector.extract_strided_slice %13 {offsets = [0, 0, 0], sizes = [1, 8, 32], strides = [1, 1, 1]} : vector<1x8x128xbf16> to vector<1x8x32xbf16>
    "tpu.trace_start"() <{level = 10 : i32, message = "bqd,bkd->bqk"}> : () -> ()
    %cst_8 = arith.constant dense<0.000000e+00> : vector<1x8x8xf32>
    %21 = tpu.matmul %18, %19, %cst_8 {dimension_numbers = #tpu.dot_dimension_numbers<[2], [2], [1], [1], [0, 0, 0, 1, 1, 1], [0], [0]>} : vector<1x8x32xbf16>, vector<1x8x32xbf16>, vector<1x8x8xf32> -> vector<1x8x8xf32>
    %cst_9 = arith.constant -1.000000e+09 : f32
    "tpu.trace_stop"() : () -> ()
    %22 = vector.broadcast %cst_9 : f32 to vector<1x8x8xf32>
    %23 = arith.select %17, %22, %21 : vector<1x8x8xi1>, vector<1x8x8xf32>
    %cst_10 = arith.constant dense<0xFF800000> : vector<1x8xf32>
    %24 = vector.multi_reduction <maximumf>, %23, %cst_10 [2] : vector<1x8x8xf32> to vector<1x8xf32>
    %25 = vector.shape_cast %24 : vector<1x8xf32> to vector<1x8x1xf32>
    %26 = vector.broadcast %25 : vector<1x8x1xf32> to vector<1x8x8xf32>
    %27 = arith.subf %23, %26 : vector<1x8x8xf32>
    %28 = math.exp %27 : vector<1x8x8xf32>
    %cst_11 = arith.constant dense<0.000000e+00> : vector<1x8xf32>
    %29 = vector.multi_reduction <add>, %28, %cst_11 [2] : vector<1x8x8xf32> to vector<1x8xf32>
    %30 = vector.shape_cast %29 : vector<1x8xf32> to vector<1x8x1xf32>
    %31 = vector.broadcast %30 : vector<1x8x1xf32> to vector<1x8x8xf32>
    %32 = arith.divf %28, %31 : vector<1x8x8xf32>
    %33 = vector.shape_cast %32 : vector<1x8x8xf32> to vector<1x1x8x8xf32>
    %c0_12 = arith.constant 0 : index
    %c0_13 = arith.constant 0 : index
    %c0_14 = arith.constant 0 : index
    %c0_15 = arith.constant 0 : index
    %34 = vector.load %arg9[%c0_12, %c0_13, %c0_14, %c0_15] : memref<1x4x8x8xf32, #tpu.memory_space<vmem>>, vector<1x1x8x8xf32>
    tpu.vector_store %arg9[%c0_12, %c0_13, %c0_14, %c0_15], %33 {strides = array<i32>} : memref<1x4x8x8xf32, #tpu.memory_space<vmem>>, vector<1x1x8x8xf32>,
    %35 = arith.truncf %32 : vector<1x8x8xf32> to vector<1x8x8xbf16>
    "tpu.trace_start"() <{level = 10 : i32, message = "bqk,bkd->bqd"}> : () -> ()
    %cst_16 = arith.constant dense<0.000000e+00> : vector<1x8x32xf32>
    %36 = tpu.matmul %35, %20, %cst_16 {dimension_numbers = #tpu.dot_dimension_numbers<[2], [1], [1], [2], [0, 0, 0, 1, 1, 2], [0], [0]>} : vector<1x8x8xbf16>, vector<1x8x32xbf16>, vector<1x8x32xf32> -> vector<1x8x32xf32>
    "tpu.trace_stop"() : () -> ()
    %37 = vector.extract_strided_slice %7 {offsets = [0, 0, 32], sizes = [1, 8, 32], strides = [1, 1, 1]} : vector<1x8x128xbf16> to vector<1x8x32xbf16>
    %38 = vector.extract_strided_slice %10 {offsets = [0, 0, 32], sizes = [1, 8, 32], strides = [1, 1, 1]} : vector<1x8x128xbf16> to vector<1x8x32xbf16>
    %39 = vector.extract_strided_slice %13 {offsets = [0, 0, 32], sizes = [1, 8, 32], strides = [1, 1, 1]} : vector<1x8x128xbf16> to vector<1x8x32xbf16>
    "tpu.trace_start"() <{level = 10 : i32, message = "bqd,bkd->bqk"}> : () -> ()
    %cst_17 = arith.constant dense<0.000000e+00> : vector<1x8x8xf32>
    %40 = tpu.matmul %37, %38, %cst_17 {dimension_numbers = #tpu.dot_dimension_numbers<[2], [2], [1], [1], [0, 0, 0, 1, 1, 1], [0], [0]>} : vector<1x8x32xbf16>, vector<1x8x32xbf16>, vector<1x8x8xf32> -> vector<1x8x8xf32>
    %cst_18 = arith.constant -1.000000e+09 : f32
    "tpu.trace_stop"() : () -> ()
    %41 = vector.broadcast %cst_18 : f32 to vector<1x8x8xf32>
    %42 = arith.select %17, %41, %40 : vector<1x8x8xi1>, vector<1x8x8xf32>
    %cst_19 = arith.constant dense<0xFF800000> : vector<1x8xf32>
    %43 = vector.multi_reduction <maximumf>, %42, %cst_19 [2] : vector<1x8x8xf32> to vector<1x8xf32>
    %44 = vector.shape_cast %43 : vector<1x8xf32> to vector<1x8x1xf32>
    %45 = vector.broadcast %44 : vector<1x8x1xf32> to vector<1x8x8xf32>
    %46 = arith.subf %42, %45 : vector<1x8x8xf32>
    %47 = math.exp %46 : vector<1x8x8xf32>
    %cst_20 = arith.constant dense<0.000000e+00> : vector<1x8xf32>
    %48 = vector.multi_reduction <add>, %47, %cst_20 [2] : vector<1x8x8xf32> to vector<1x8xf32>
    %49 = vector.shape_cast %48 : vector<1x8xf32> to vector<1x8x1xf32>
    %50 = vector.broadcast %49 : vector<1x8x1xf32> to vector<1x8x8xf32>
    %51 = arith.divf %47, %50 : vector<1x8x8xf32>
    %52 = vector.shape_cast %51 : vector<1x8x8xf32> to vector<1x1x8x8xf32>
    %c0_21 = arith.constant 0 : index
    %c1 = arith.constant 1 : index
    %c0_22 = arith.constant 0 : index
    %c0_23 = arith.constant 0 : index
    %53 = vector.load %arg9[%c0_21, %c1, %c0_22, %c0_23] : memref<1x4x8x8xf32, #tpu.memory_space<vmem>>, vector<1x1x8x8xf32>
    tpu.vector_store %arg9[%c0_21, %c1, %c0_22, %c0_23], %52 {strides = array<i32>} : memref<1x4x8x8xf32, #tpu.memory_space<vmem>>, vector<1x1x8x8xf32>,
    %54 = arith.truncf %51 : vector<1x8x8xf32> to vector<1x8x8xbf16>
    "tpu.trace_start"() <{level = 10 : i32, message = "bqk,bkd->bqd"}> : () -> ()
    %cst_24 = arith.constant dense<0.000000e+00> : vector<1x8x32xf32>
    %55 = tpu.matmul %54, %39, %cst_24 {dimension_numbers = #tpu.dot_dimension_numbers<[2], [1], [1], [2], [0, 0, 0, 1, 1, 2], [0], [0]>} : vector<1x8x8xbf16>, vector<1x8x32xbf16>, vector<1x8x32xf32> -> vector<1x8x32xf32>
    "tpu.trace_stop"() : () -> ()
    %56 = vector.extract_strided_slice %7 {offsets = [0, 0, 64], sizes = [1, 8, 32], strides = [1, 1, 1]} : vector<1x8x128xbf16> to vector<1x8x32xbf16>
    %57 = vector.extract_strided_slice %10 {offsets = [0, 0, 64], sizes = [1, 8, 32], strides = [1, 1, 1]} : vector<1x8x128xbf16> to vector<1x8x32xbf16>
    %58 = vector.extract_strided_slice %13 {offsets = [0, 0, 64], sizes = [1, 8, 32], strides = [1, 1, 1]} : vector<1x8x128xbf16> to vector<1x8x32xbf16>
    "tpu.trace_start"() <{level = 10 : i32, message = "bqd,bkd->bqk"}> : () -> ()
    %cst_25 = arith.constant dense<0.000000e+00> : vector<1x8x8xf32>
    %59 = tpu.matmul %56, %57, %cst_25 {dimension_numbers = #tpu.dot_dimension_numbers<[2], [2], [1], [1], [0, 0, 0, 1, 1, 1], [0], [0]>} : vector<1x8x32xbf16>, vector<1x8x32xbf16>, vector<1x8x8xf32> -> vector<1x8x8xf32>
    %cst_26 = arith.constant -1.000000e+09 : f32
    "tpu.trace_stop"() : () -> ()
    %60 = vector.broadcast %cst_26 : f32 to vector<1x8x8xf32>
    %61 = arith.select %17, %60, %59 : vector<1x8x8xi1>, vector<1x8x8xf32>
    %cst_27 = arith.constant dense<0xFF800000> : vector<1x8xf32>
    %62 = vector.multi_reduction <maximumf>, %61, %cst_27 [2] : vector<1x8x8xf32> to vector<1x8xf32>
    %63 = vector.shape_cast %62 : vector<1x8xf32> to vector<1x8x1xf32>
    %64 = vector.broadcast %63 : vector<1x8x1xf32> to vector<1x8x8xf32>
    %65 = arith.subf %61, %64 : vector<1x8x8xf32>
    %66 = math.exp %65 : vector<1x8x8xf32>
    %cst_28 = arith.constant dense<0.000000e+00> : vector<1x8xf32>
    %67 = vector.multi_reduction <add>, %66, %cst_28 [2] : vector<1x8x8xf32> to vector<1x8xf32>
    %68 = vector.shape_cast %67 : vector<1x8xf32> to vector<1x8x1xf32>
    %69 = vector.broadcast %68 : vector<1x8x1xf32> to vector<1x8x8xf32>
    %70 = arith.divf %66, %69 : vector<1x8x8xf32>
    %71 = vector.shape_cast %70 : vector<1x8x8xf32> to vector<1x1x8x8xf32>
    %c0_29 = arith.constant 0 : index
    %c2 = arith.constant 2 : index
    %c0_30 = arith.constant 0 : index
    %c0_31 = arith.constant 0 : index
    %72 = vector.load %arg9[%c0_29, %c2, %c0_30, %c0_31] : memref<1x4x8x8xf32, #tpu.memory_space<vmem>>, vector<1x1x8x8xf32>
    tpu.vector_store %arg9[%c0_29, %c2, %c0_30, %c0_31], %71 {strides = array<i32>} : memref<1x4x8x8xf32, #tpu.memory_space<vmem>>, vector<1x1x8x8xf32>,
    %73 = arith.truncf %70 : vector<1x8x8xf32> to vector<1x8x8xbf16>
    "tpu.trace_start"() <{level = 10 : i32, message = "bqk,bkd->bqd"}> : () -> ()
    %cst_32 = arith.constant dense<0.000000e+00> : vector<1x8x32xf32>
    %74 = tpu.matmul %73, %58, %cst_32 {dimension_numbers = #tpu.dot_dimension_numbers<[2], [1], [1], [2], [0, 0, 0, 1, 1, 2], [0], [0]>} : vector<1x8x8xbf16>, vector<1x8x32xbf16>, vector<1x8x32xf32> -> vector<1x8x32xf32>
    "tpu.trace_stop"() : () -> ()
    %75 = vector.extract_strided_slice %7 {offsets = [0, 0, 96], sizes = [1, 8, 32], strides = [1, 1, 1]} : vector<1x8x128xbf16> to vector<1x8x32xbf16>
    %76 = vector.extract_strided_slice %10 {offsets = [0, 0, 96], sizes = [1, 8, 32], strides = [1, 1, 1]} : vector<1x8x128xbf16> to vector<1x8x32xbf16>
    %77 = vector.extract_strided_slice %13 {offsets = [0, 0, 96], sizes = [1, 8, 32], strides = [1, 1, 1]} : vector<1x8x128xbf16> to vector<1x8x32xbf16>
    "tpu.trace_start"() <{level = 10 : i32, message = "bqd,bkd->bqk"}> : () -> ()
    %cst_33 = arith.constant dense<0.000000e+00> : vector<1x8x8xf32>
    %78 = tpu.matmul %75, %76, %cst_33 {dimension_numbers = #tpu.dot_dimension_numbers<[2], [2], [1], [1], [0, 0, 0, 1, 1, 1], [0], [0]>} : vector<1x8x32xbf16>, vector<1x8x32xbf16>, vector<1x8x8xf32> -> vector<1x8x8xf32>
    %cst_34 = arith.constant -1.000000e+09 : f32
    "tpu.trace_stop"() : () -> ()
    %79 = vector.broadcast %cst_34 : f32 to vector<1x8x8xf32>
    %80 = arith.select %17, %79, %78 : vector<1x8x8xi1>, vector<1x8x8xf32>
    %cst_35 = arith.constant dense<0xFF800000> : vector<1x8xf32>
    %81 = vector.multi_reduction <maximumf>, %80, %cst_35 [2] : vector<1x8x8xf32> to vector<1x8xf32>
    %82 = vector.shape_cast %81 : vector<1x8xf32> to vector<1x8x1xf32>
    %83 = vector.broadcast %82 : vector<1x8x1xf32> to vector<1x8x8xf32>
    %84 = arith.subf %80, %83 : vector<1x8x8xf32>
    %85 = math.exp %84 : vector<1x8x8xf32>
    %cst_36 = arith.constant dense<0.000000e+00> : vector<1x8xf32>
    %86 = vector.multi_reduction <add>, %85, %cst_36 [2] : vector<1x8x8xf32> to vector<1x8xf32>
    %87 = vector.shape_cast %86 : vector<1x8xf32> to vector<1x8x1xf32>
    %88 = vector.broadcast %87 : vector<1x8x1xf32> to vector<1x8x8xf32>
    %89 = arith.divf %85, %88 : vector<1x8x8xf32>
    %90 = vector.shape_cast %89 : vector<1x8x8xf32> to vector<1x1x8x8xf32>
    %c0_37 = arith.constant 0 : index
    %c3 = arith.constant 3 : index
    %c0_38 = arith.constant 0 : index
    %c0_39 = arith.constant 0 : index
    %91 = vector.load %arg9[%c0_37, %c3, %c0_38, %c0_39] : memref<1x4x8x8xf32, #tpu.memory_space<vmem>>, vector<1x1x8x8xf32>
    tpu.vector_store %arg9[%c0_37, %c3, %c0_38, %c0_39], %90 {strides = array<i32>} : memref<1x4x8x8xf32, #tpu.memory_space<vmem>>, vector<1x1x8x8xf32>,
    %92 = arith.truncf %89 : vector<1x8x8xf32> to vector<1x8x8xbf16>
    "tpu.trace_start"() <{level = 10 : i32, message = "bqk,bkd->bqd"}> : () -> ()
    %cst_40 = arith.constant dense<0.000000e+00> : vector<1x8x32xf32>
    %93 = tpu.matmul %92, %77, %cst_40 {dimension_numbers = #tpu.dot_dimension_numbers<[2], [1], [1], [2], [0, 0, 0, 1, 1, 2], [0], [0]>} : vector<1x8x8xbf16>, vector<1x8x32xbf16>, vector<1x8x32xf32> -> vector<1x8x32xf32>
    "tpu.trace_stop"() : () -> ()
    %94 = tpu.concatenate %36, %55, %74, %93 in 2 : vector<1x8x32xf32>, vector<1x8x32xf32>, vector<1x8x32xf32>, vector<1x8x32xf32> -> vector<1x8x128xf32>
    %95 = vector.shape_cast %94 : vector<1x8x128xf32> to vector<8x128xf32>
    %96 = arith.truncf %95 : vector<8x128xf32> to vector<8x128xbf16>
    %c0_41 = arith.constant 0 : index
    %c0_42 = arith.constant 0 : index
    %97 = vector.load %arg4[%c0_41, %c0_42] : memref<128x128xbf16, #tpu.memory_space<vmem>>, vector<128x128xbf16>
    %cst_43 = arith.constant dense<0.000000e+00> : vector<8x128xf32>
    %98 = tpu.matmul %96, %97, %cst_43 {dimension_numbers = #tpu.dot_dimension_numbers<[1], [0], [0], [1], [0, 0, 1, 1], [], []>} : vector<8x128xbf16>, vector<128x128xbf16>, vector<8x128xf32> -> vector<8x128xf32>
    %99 = arith.addf %98, %1 : vector<8x128xf32>
    %cst_44 = arith.constant dense<0.000000e+00> : vector<8xf32>
    %100 = vector.multi_reduction <add>, %99, %cst_44 [1] : vector<8x128xf32> to vector<8xf32>
    %101 = vector.shape_cast %100 : vector<8xf32> to vector<8x1xf32>
    %cst_45 = arith.constant 1.280000e+02 : f32
    %102 = vector.broadcast %cst_45 : f32 to vector<8x1xf32>
    %103 = arith.divf %101, %102 : vector<8x1xf32>
    %104 = arith.mulf %99, %99 : vector<8x128xf32>
    %cst_46 = arith.constant dense<0.000000e+00> : vector<8xf32>
    %105 = vector.multi_reduction <add>, %104, %cst_46 [1] : vector<8x128xf32> to vector<8xf32>
    %106 = vector.shape_cast %105 : vector<8xf32> to vector<8x1xf32>
    %cst_47 = arith.constant 1.280000e+02 : f32
    %107 = vector.broadcast %cst_47 : f32 to vector<8x1xf32>
    %108 = arith.divf %106, %107 : vector<8x1xf32>
    %109 = arith.mulf %103, %103 : vector<8x1xf32>
    %110 = arith.subf %108, %109 : vector<8x1xf32>
    %cst_48 = arith.constant 0.000000e+00 : f32
    %111 = vector.broadcast %cst_48 : f32 to vector<8x1xf32>
    %112 = arith.maximumf %110, %111 : vector<8x1xf32>
    %113 = vector.broadcast %103 : vector<8x1xf32> to vector<8x128xf32>
    %114 = arith.subf %99, %113 : vector<8x128xf32>
    %cst_49 = arith.constant 9.99999974E-6 : f32
    %115 = vector.broadcast %cst_49 : f32 to vector<8x1xf32>
    %116 = arith.addf %112, %115 : vector<8x1xf32>
    %117 = math.rsqrt %116 : vector<8x1xf32>
    %118 = vector.broadcast %117 : vector<8x1xf32> to vector<8x128xf32>
    %119 = arith.mulf %114, %118 : vector<8x128xf32>
    %120 = arith.truncf %119 : vector<8x128xf32> to vector<8x128xbf16>
    %c0_50 = arith.constant 0 : index
    %c0_51 = arith.constant 0 : index
    %121 = vector.load %arg5[%c0_50, %c0_51] : memref<128x256xbf16, #tpu.memory_space<vmem>>, vector<128x256xbf16>
    %cst_52 = arith.constant dense<0.000000e+00> : vector<8x256xf32>
    %122 = tpu.matmul %120, %121, %cst_52 {dimension_numbers = #tpu.dot_dimension_numbers<[1], [0], [0], [1], [0, 0, 1, 1], [], []>} : vector<8x128xbf16>, vector<128x256xbf16>, vector<8x256xf32> -> vector<8x256xf32>
    %cst_53 = arith.constant 5.000000e-01 : f32
    %123 = vector.broadcast %cst_53 : f32 to vector<8x256xf32>
    %124 = arith.mulf %123, %122 : vector<8x256xf32>
    %cst_54 = arith.constant 0.707106769 : f32
    %125 = vector.broadcast %cst_54 : f32 to vector<8x256xf32>
    %126 = arith.mulf %122, %125 : vector<8x256xf32>
    %127 = math.erf %126 : vector<8x256xf32>
    %cst_55 = arith.constant 1.000000e+00 : f32
    %128 = vector.broadcast %cst_55 : f32 to vector<8x256xf32>
    %129 = arith.addf %128, %127 : vector<8x256xf32>
    %130 = arith.mulf %124, %129 : vector<8x256xf32>
    %131 = arith.truncf %130 : vector<8x256xf32> to vector<8x256xbf16>
    %c0_56 = arith.constant 0 : index
    %c0_57 = arith.constant 0 : index
    %132 = vector.load %arg6[%c0_56, %c0_57] : memref<256x128xbf16, #tpu.memory_space<vmem>>, vector<256x128xbf16>
    %cst_58 = arith.constant dense<0.000000e+00> : vector<8x128xf32>
    %133 = tpu.matmul %131, %132, %cst_58 {dimension_numbers = #tpu.dot_dimension_numbers<[1], [0], [0], [1], [0, 0, 1, 1], [], []>} : vector<8x256xbf16>, vector<256x128xbf16>, vector<8x128xf32> -> vector<8x128xf32>
    %c0_59 = arith.constant 0 : index
    %c0_60 = arith.constant 0 : index
    %134 = vector.load %arg7[%c0_59, %c0_60] : memref<1x128xf32, #tpu.memory_space<vmem>>, vector<1x128xf32>
    %135 = vector.broadcast %134 : vector<1x128xf32> to vector<8x128xf32>
    %136 = arith.addf %133, %135 : vector<8x128xf32>
    %137 = arith.addf %136, %119 : vector<8x128xf32>
    %cst_61 = arith.constant dense<0.000000e+00> : vector<8xf32>
    %138 = vector.multi_reduction <add>, %137, %cst_61 [1] : vector<8x128xf32> to vector<8xf32>
    %139 = vector.shape_cast %138 : vector<8xf32> to vector<8x1xf32>
    %cst_62 = arith.constant 1.280000e+02 : f32
    %140 = vector.broadcast %cst_62 : f32 to vector<8x1xf32>
    %141 = arith.divf %139, %140 : vector<8x1xf32>
    %142 = arith.mulf %137, %137 : vector<8x128xf32>
    %cst_63 = arith.constant dense<0.000000e+00> : vector<8xf32>
    %143 = vector.multi_reduction <add>, %142, %cst_63 [1] : vector<8x128xf32> to vector<8xf32>
    %144 = vector.shape_cast %143 : vector<8xf32> to vector<8x1xf32>
    %cst_64 = arith.constant 1.280000e+02 : f32
    %145 = vector.broadcast %cst_64 : f32 to vector<8x1xf32>
    %146 = arith.divf %144, %145 : vector<8x1xf32>
    %147 = arith.mulf %141, %141 : vector<8x1xf32>
    %148 = arith.subf %146, %147 : vector<8x1xf32>
    %cst_65 = arith.constant 0.000000e+00 : f32
    %149 = vector.broadcast %cst_65 : f32 to vector<8x1xf32>
    %150 = arith.maximumf %148, %149 : vector<8x1xf32>
    %151 = vector.broadcast %141 : vector<8x1xf32> to vector<8x128xf32>
    %152 = arith.subf %137, %151 : vector<8x128xf32>
    %cst_66 = arith.constant 9.99999974E-6 : f32
    %153 = vector.broadcast %cst_66 : f32 to vector<8x1xf32>
    %154 = arith.addf %150, %153 : vector<8x1xf32>
    %155 = math.rsqrt %154 : vector<8x1xf32>
    %156 = vector.broadcast %155 : vector<8x1xf32> to vector<8x128xf32>
    %157 = arith.mulf %152, %156 : vector<8x128xf32>
    %158 = vector.shape_cast %157 : vector<8x128xf32> to vector<1x8x128xf32>
    %c0_67 = arith.constant 0 : index
    %c0_68 = arith.constant 0 : index
    %c0_69 = arith.constant 0 : index
    %159 = vector.load %arg8[%c0_67, %c0_68, %c0_69] : memref<1x8x128xf32, #tpu.memory_space<vmem>>, vector<1x8x128xf32>
    tpu.vector_store %arg8[%c0_67, %c0_68, %c0_69], %158 {strides = array<i32>} : memref<1x8x128xf32, #tpu.memory_space<vmem>>, vector<1x8x128xf32>,
    return
  }
  func.func @transform_0(%arg0: i32) -> (i32, i32, i32) {
    %c0_i32 = arith.constant 0 : i32
    %c0_i32_0 = arith.constant 0 : i32
    %c0_i32_1 = arith.constant 0 : i32
    return %arg0, %c0_i32, %c0_i32_0 : i32, i32, i32
  }
  func.func @transform_1(%arg0: i32) -> (i32, i32, i32) {
    %c0_i32 = arith.constant 0 : i32
    %c0_i32_0 = arith.constant 0 : i32
    %c0_i32_1 = arith.constant 0 : i32
    return %arg0, %c0_i32, %c0_i32_0 : i32, i32, i32
  }
  func.func @transform_2(%arg0: i32) -> (i32, i32) {
    %c0_i32 = arith.constant 0 : i32
    %c0_i32_0 = arith.constant 0 : i32
    %c0_i32_1 = arith.constant 0 : i32
    return %c0_i32, %c0_i32_0 : i32, i32
  }
  func.func @transform_3(%arg0: i32) -> (i32, i32) {
    %c0_i32 = arith.constant 0 : i32
    %c0_i32_0 = arith.constant 0 : i32
    %c0_i32_1 = arith.constant 0 : i32
    return %c0_i32, %c0_i32_0 : i32, i32
  }
  func.func @transform_4(%arg0: i32) -> (i32, i32) {
    %c0_i32 = arith.constant 0 : i32
    %c0_i32_0 = arith.constant 0 : i32
    %c0_i32_1 = arith.constant 0 : i32
    return %c0_i32, %c0_i32_0 : i32, i32
  }
  func.func @transform_5(%arg0: i32) -> (i32, i32) {
    %c0_i32 = arith.constant 0 : i32
    %c0_i32_0 = arith.constant 0 : i32
    %c0_i32_1 = arith.constant 0 : i32
    return %c0_i32, %c0_i32_0 : i32, i32
  }
  func.func @transform_6(%arg0: i32) -> (i32, i32) {
    %c0_i32 = arith.constant 0 : i32
    %c0_i32_0 = arith.constant 0 : i32
    %c0_i32_1 = arith.constant 0 : i32
    return %c0_i32, %c0_i32_0 : i32, i32
  }
  func.func @transform_7(%arg0: i32) -> (i32, i32, i32) {
    %c0_i32 = arith.constant 0 : i32
    %c0_i32_0 = arith.constant 0 : i32
    %c0_i32_1 = arith.constant 0 : i32
    return %arg0, %c0_i32, %c0_i32_0 : i32, i32, i32
  }
  func.func @transform_8(%arg0: i32) -> (i32, i32, i32, i32) {
    %c0_i32 = arith.constant 0 : i32
    %c0_i32_0 = arith.constant 0 : i32
    %c0_i32_1 = arith.constant 0 : i32
    %c0_i32_2 = arith.constant 0 : i32
    return %arg0, %c0_i32, %c0_i32_0, %c0_i32_1 : i32, i32, i32, i32
  }
}

</mosaic_0001>

<llo_original>
// kernel: tpu_custom_call.1
$region0: #{tpu_custom_call.1}
  #allocation0 [shape = 'u32[]', space=smem, size = 0x4, offset = 0x4, fixed_abs, tag = 'smem constant byte address 0x4 - core index']
  #allocation1 [shape = 'u32[144,128]{1,0:T(1,128)}', space=vmem, size = 0x12000, scoped, tag = 'internal scratch']
  %s0 = inlined_call_operand.hbm [shape: f32[2,8,128], index: 0, kind: input, shape index: {}]
  %s1 = inlined_call_operand.hbm [shape: s8[2,8,8], index: 1, kind: input, shape index: {}]
  %s2 = inlined_call_operand.hbm [shape: bf16[128,384], index: 2, kind: input, shape index: {}]
  %s3 = inlined_call_operand.hbm [shape: bf16[128,128], index: 3, kind: input, shape index: {}]
  %s4 = inlined_call_operand.hbm [shape: bf16[128,256], index: 4, kind: input, shape index: {}]
  %s5 = inlined_call_operand.hbm [shape: bf16[256,128], index: 5, kind: input, shape index: {}]
  %s6 = inlined_call_operand.hbm [shape: f32[1,128], index: 6, kind: input, shape index: {}]
  %s7 = inlined_call_operand.hbm [shape: f32[2,8,128], index: 7, kind: output, shape index: {0}]
  %s8 = inlined_call_operand.hbm [shape: f32[2,4,8,8], index: 8, kind: output, shape index: {1}]
  %9 = xla_tuple %s7, %s8
  %s10 = sld [smem:[#allocation0]]
  $region97: #{tpu_custom_call.1} parent=0
    _
  %s12 = ssub.s32 1, %s10
  %s13 = scalar_select 0, %s12, %s10
  $region1: #{tpu_custom_call.1} parent=0
    #allocation2 [shape = 'u8[8192]{0}', space=vmem, size = 0x2000, scoped, tag = 'input window, operand 0']
    #allocation3 [shape = 's32[2]{0}', space=sflag, size = 0x8, scoped, tag = 'scoped memory for tpu_custom_call.1']
    #allocation4 [shape = 's32[2]{0}', space=sflag, size = 0x8, scoped, tag = 'scoped memory for tpu_custom_call.1']
    #allocation5 [shape = 'u8[2048]{0}', space=vmem, size = 0x800, scoped, tag = 'input window, operand 1']
    #allocation6 [shape = 's32[2]{0}', space=sflag, size = 0x8, scoped, tag = 'scoped memory for tpu_custom_call.1']
    #allocation7 [shape = 'u8[98304]{0}', space=vmem, size = 0x18000, scoped, tag = 'input window, operand 2, single buffered']
    #allocation8 [shape = 'u8[32768]{0}', space=vmem, size = 0x8000, scoped, tag = 'input window, operand 3, single buffered']
    #allocation9 [shape = 's32[1]{0}', space=sflag, size = 0x4, scoped, tag = 'scoped memory for tpu_custom_call.1']
    #allocation10 [shape = 'u8[65536]{0}', space=vmem, size = 0x10000, scoped, tag = 'input window, operand 4, single buffered']
    #allocation11 [shape = 'u8[65536]{0}', space=vmem, size = 0x10000, scoped, tag = 'input window, operand 5, single buffered']
    #allocation12 [shape = 's32[1]{0}', space=sflag, size = 0x4, scoped, tag = 'scoped memory for tpu_custom_call.1']
    #allocation13 [shape = 'u8[512]{0}', space=vmem, size = 0x400, scoped, tag = 'input window, operand 6, single buffered']
    #allocation14 [shape = 'u8[8192]{0}', space=vmem, size = 0x2000, scoped, tag = 'output window, operand 0']
    #allocation15 [shape = 'u8[32768]{0}', space=vmem, size = 0x8000, scoped, tag = 'output window, operand 1']
    #allocation16 [shape = 's32[2]{0}', space=sflag, size = 0x8, scoped, tag = 'scoped memory for tpu_custom_call.1']
    %14 = vsyncpa [#allocation3], 0
    %s15 = scalar_lea.sflag [#allocation3], 1
    %16 = vsyncpa %s15, 0
    %17 = vsyncpa [#allocation6], 0
    %s18 = scalar_lea.sflag [#allocation6], 1
    %19 = vsyncpa %s18, 0
    %20 = vsyncpa [#allocation9], 0
    %21 = vsyncpa [#allocation12], 0
    %22 = vsyncpa [#allocation4], 0
    %s23 = scalar_lea.sflag [#allocation4], 1
    %24 = vsyncpa %s23, 0
    %25 = vsyncpa [#allocation16], 0
    %s26 = scalar_lea.sflag [#allocation16], 1
    %27 = vsyncpa %s26, 0
    loop: start=0, step=1, limit=4
    $region2: #{tpu_custom_call.1} parent=1 // loop_pre_header
      _
    $region3: #{tpu_custom_call.1} parent=1 // loop_header
      %s29 = sphi 0, %s33
      %p30 = scmp.ge.s32.totalorder %s29, 4
      %s39 = sphi 0, %s41
      %s42 = sphi 0, %s39
      %s43 = sphi 0, %s42
      %s59 = sphi 0, %s43
      %s65 = sphi 0, %s67
      %s68 = sphi 0, %s65
      %s69 = sphi 0, %s68
      %s85 = sphi 0, %s69
      %s89 = sphi 0, %s89
      %s91 = sphi 0, %s89
      %s92 = sphi 0, %s91
      %s106 = sphi 0, %s92
      %s110 = sphi 0, %s110
      %s112 = sphi 0, %s110
      %s113 = sphi 0, %s112
      %s127 = sphi 0, %s113
      %s131 = sphi 0, %s131
      %s133 = sphi 0, %s131
      %s134 = sphi 0, %s133
      %s148 = sphi 0, %s134
      %s152 = sphi 0, %s152
      %s154 = sphi 0, %s152
      %s155 = sphi 0, %s154
      %s169 = sphi 0, %s155
      %s173 = sphi 0, %s173
      %s175 = sphi 0, %s173
      %s176 = sphi 0, %s175
      %s190 = sphi 0, %s176
      %s196 = sphi 0, %s198
      %s199 = sphi 0, %s196
      %s200 = sphi 0, %s199
      %s216 = sphi 0, %s200
      %s222 = sphi 0, %s224
      %s225 = sphi 0, %s222
      %s226 = sphi 0, %s225
      %s242 = sphi 0, %s226
    $region4: #{tpu_custom_call.1} parent=1 // loop_header_branch
      %32 = sbr.rel (%p30) target = $region8
    $region5: #{tpu_custom_call.1} parent=1 // loop_body
      %s34 = ssub.s32 %s29, 1
      %s35 = ssub.s32 %s29, 2
      %s36 = sadd.s32 %s29, 1
      %s37 = ssub.s32 %s29, %s36
      %p38 = scmp.eq.s32.totalorder %s37, 0
      %s40 = sadd.s32 %s39, 1
      %s41 = scalar_select %p38, %s39, %s40
      %p44 = pneg %p38
      %p45 = scmp.eq.s32.totalorder %s29, 1
      %p46 = por %p44, %p45
      %p47 = scmp.ne.s32.totalorder %s39, %s42
      %p48 = scmp.eq.s32.totalorder %s29, 0
      %p49 = por %p47, %p48
      %p50 = scmp.ne.s32.totalorder %s39, %s42
      %p51 = scmp.eq.s32.totalorder %s34, 1
      %p52 = por %p50, %p51
      %p53 = scmp.ne.s32.totalorder %s42, %s43
      %p54 = scmp.eq.s32.totalorder %s34, 0
      %p55 = por %p53, %p54
      %p56 = scmp.ne.s32.totalorder %s42, %s43
      %p57 = scmp.eq.s32.totalorder %s35, 1
      %p58 = por %p56, %p57
      %p60 = scmp.ne.s32.totalorder %s43, %s59
      %p61 = scmp.eq.s32.totalorder %s35, 0
      %p62 = por %p60, %p61
      %s63 = ssub.s32 %s29, %s36
      %p64 = scmp.eq.s32.totalorder %s63, 0
      %s66 = sadd.s32 %s65, 1
      %s67 = scalar_select %p64, %s65, %s66
      %p70 = pneg %p64
      %p71 = scmp.eq.s32.totalorder %s29, 1
      %p72 = por %p70, %p71
      %p73 = scmp.ne.s32.totalorder %s65, %s68
      %p74 = scmp.eq.s32.totalorder %s29, 0
      %p75 = por %p73, %p74
      %p76 = scmp.ne.s32.totalorder %s65, %s68
      %p77 = scmp.eq.s32.totalorder %s34, 1
      %p78 = por %p76, %p77
      %p79 = scmp.ne.s32.totalorder %s68, %s69
      %p80 = scmp.eq.s32.totalorder %s34, 0
      %p81 = por %p79, %p80
      %p82 = scmp.ne.s32.totalorder %s68, %s69
      %p83 = scmp.eq.s32.totalorder %s35, 1
      %p84 = por %p82, %p83
      %p86 = scmp.ne.s32.totalorder %s69, %s85
      %p87 = scmp.eq.s32.totalorder %s35, 0
      %p88 = por %p86, %p87
      %s90 = sadd.s32 %s89, 1
      %p93 = scmp.eq.s32.totalorder %s29, 1
      %p94 = scmp.ne.s32.totalorder %s89, %s91
      %p95 = scmp.eq.s32.totalorder %s29, 0
      %p96 = por %p94, %p95
      %p97 = scmp.ne.s32.totalorder %s89, %s91
      %p98 = scmp.eq.s32.totalorder %s34, 1
      %p99 = por %p97, %p98
      %p100 = scmp.ne.s32.totalorder %s91, %s92
      %p101 = scmp.eq.s32.totalorder %s34, 0
      %p102 = por %p100, %p101
      %p103 = scmp.ne.s32.totalorder %s91, %s92
      %p104 = scmp.eq.s32.totalorder %s35, 1
      %p105 = por %p103, %p104
      %p107 = scmp.ne.s32.totalorder %s92, %s106
      %p108 = scmp.eq.s32.totalorder %s35, 0
      %p109 = por %p107, %p108
      %s111 = sadd.s32 %s110, 1
      %p114 = scmp.eq.s32.totalorder %s29, 1
      %p115 = scmp.ne.s32.totalorder %s110, %s112
      %p116 = scmp.eq.s32.totalorder %s29, 0
      %p117 = por %p115, %p116
      %p118 = scmp.ne.s32.totalorder %s110, %s112
      %p119 = scmp.eq.s32.totalorder %s34, 1
      %p120 = por %p118, %p119
      %p121 = scmp.ne.s32.totalorder %s112, %s113
      %p122 = scmp.eq.s32.totalorder %s34, 0
      %p123 = por %p121, %p122
      %p124 = scmp.ne.s32.totalorder %s112, %s113
      %p125 = scmp.eq.s32.totalorder %s35, 1
      %p126 = por %p124, %p125
      %p128 = scmp.ne.s32.totalorder %s113, %s127
      %p129 = scmp.eq.s32.totalorder %s35, 0
      %p130 = por %p128, %p129
      %s132 = sadd.s32 %s131, 1
      %p135 = scmp.eq.s32.totalorder %s29, 1
      %p136 = scmp.ne.s32.totalorder %s131, %s133
      %p137 = scmp.eq.s32.totalorder %s29, 0
      %p138 = por %p136, %p137
      %p139 = scmp.ne.s32.totalorder %s131, %s133
      %p140 = scmp.eq.s32.totalorder %s34, 1
      %p141 = por %p139, %p140
      %p142 = scmp.ne.s32.totalorder %s133, %s134
      %p143 = scmp.eq.s32.totalorder %s34, 0
      %p144 = por %p142, %p143
      %p145 = scmp.ne.s32.totalorder %s133, %s134
      %p146 = scmp.eq.s32.totalorder %s35, 1
      %p147 = por %p145, %p146
      %p149 = scmp.ne.s32.totalorder %s134, %s148
      %p150 = scmp.eq.s32.totalorder %s35, 0
      %p151 = por %p149, %p150
      %s153 = sadd.s32 %s152, 1
      %p156 = scmp.eq.s32.totalorder %s29, 1
      %p157 = scmp.ne.s32.totalorder %s152, %s154
      %p158 = scmp.eq.s32.totalorder %s29, 0
      %p159 = por %p157, %p158
      %p160 = scmp.ne.s32.totalorder %s152, %s154
      %p161 = scmp.eq.s32.totalorder %s34, 1
      %p162 = por %p160, %p161
      %p163 = scmp.ne.s32.totalorder %s154, %s155
      %p164 = scmp.eq.s32.totalorder %s34, 0
      %p165 = por %p163, %p164
      %p166 = scmp.ne.s32.totalorder %s154, %s155
      %p167 = scmp.eq.s32.totalorder %s35, 1
      %p168 = por %p166, %p167
      %p170 = scmp.ne.s32.totalorder %s155, %s169
      %p171 = scmp.eq.s32.totalorder %s35, 0
      %p172 = por %p170, %p171
      %s174 = sadd.s32 %s173, 1
      %p177 = scmp.eq.s32.totalorder %s29, 1
      %p178 = scmp.ne.s32.totalorder %s173, %s175
      %p179 = scmp.eq.s32.totalorder %s29, 0
      %p180 = por %p178, %p179
      %p181 = scmp.ne.s32.totalorder %s173, %s175
      %p182 = scmp.eq.s32.totalorder %s34, 1
      %p183 = por %p181, %p182
      %p184 = scmp.ne.s32.totalorder %s175, %s176
      %p185 = scmp.eq.s32.totalorder %s34, 0
      %p186 = por %p184, %p185
      %p187 = scmp.ne.s32.totalorder %s175, %s176
      %p188 = scmp.eq.s32.totalorder %s35, 1
      %p189 = por %p187, %p188
      %p191 = scmp.ne.s32.totalorder %s176, %s190
      %p192 = scmp.eq.s32.totalorder %s35, 0
      %p193 = por %p191, %p192
      %s194 = ssub.s32 %s29, %s36
      %p195 = scmp.eq.s32.totalorder %s194, 0
      %s197 = sadd.s32 %s196, 1
      %s198 = scalar_select %p195, %s196, %s197
      %p201 = pneg %p195
      %p202 = scmp.eq.s32.totalorder %s29, 1
      %p203 = por %p201, %p202
      %p204 = scmp.ne.s32.totalorder %s196, %s199
      %p205 = scmp.eq.s32.totalorder %s29, 0
      %p206 = por %p204, %p205
      %p207 = scmp.ne.s32.totalorder %s196, %s199
      %p208 = scmp.eq.s32.totalorder %s34, 1
      %p209 = por %p207, %p208
      %p210 = scmp.ne.s32.totalorder %s199, %s200
      %p211 = scmp.eq.s32.totalorder %s34, 0
      %p212 = por %p210, %p211
      %p213 = scmp.ne.s32.totalorder %s199, %s200
      %p214 = scmp.eq.s32.totalorder %s35, 1
      %p215 = por %p213, %p214
      %p217 = scmp.ne.s32.totalorder %s200, %s216
      %p218 = scmp.eq.s32.totalorder %s35, 0
      %p219 = por %p217, %p218
      %s220 = ssub.s32 %s29, %s36
      %p221 = scmp.eq.s32.totalorder %s220, 0
      %s223 = sadd.s32 %s222, 1
      %s224 = scalar_select %p221, %s222, %s223
      %p227 = pneg %p221
      %p228 = scmp.eq.s32.totalorder %s29, 1
      %p229 = por %p227, %p228
      %p230 = scmp.ne.s32.totalorder %s222, %s225
      %p231 = scmp.eq.s32.totalorder %s29, 0
      %p232 = por %p230, %p231
      %p233 = scmp.ne.s32.totalorder %s222, %s225
      %p234 = scmp.eq.s32.totalorder %s34, 1
      %p235 = por %p233, %p234
      %p236 = scmp.ne.s32.totalorder %s225, %s226
      %p237 = scmp.eq.s32.totalorder %s34, 0
      %p238 = por %p236, %p237
      %p239 = scmp.ne.s32.totalorder %s225, %s226
      %p240 = scmp.eq.s32.totalorder %s35, 1
      %p241 = por %p239, %p240
      %p243 = scmp.ne.s32.totalorder %s226, %s242
      %p244 = scmp.eq.s32.totalorder %s35, 0
      %p245 = por %p243, %p244
      %p246 = scmp.le.s32.totalorder 1, %s29
      %p247 = scmp.lt.s32.totalorder %s29, 3
      %p248 = pnand %p246, %p247
      %p249 = pneg %p248
      // Predicated region
      $region9: #{tpu_custom_call.1} parent=5 // pred_check
        _
      $region10: #{tpu_custom_call.1} parent=5 // pred_check_branch
        %251 = sbr.rel (%p248) target = $region12
      $region11: #{tpu_custom_call.1} parent=5 // pred_region
        %s252 = ssub.s32 %s29, 1
        // Predicated region
        $region13: #{tpu_custom_call.1} parent=11 // pred_check
          %p253 = pneg %p102
        $region14: #{tpu_custom_call.1} parent=11 // pred_check_branch
          %255 = sbr.rel (%p253) target = $region16
        $region15: #{tpu_custom_call.1} parent=11 // pred_region
          %s257 = ssub.s32 3072, 3072
          %258 = vsyncadd [#allocation6], %s257
          %s259 = sshll.u32 [#allocation7], 4
          %s260 = int_to_ptr.vmem [resolvable:$true] %s259
          %265 = dma.hbm_to_vmem [thread:$0]  %s2, 3072, %s260, [#allocation6], 192, 192, 12
        $region16: #{tpu_custom_call.1} parent=11 // pred_fallthru
          _
        // Predicated region
        $region17: #{tpu_custom_call.1} parent=11 // pred_check
          %p266 = pneg %p123
        $region18: #{tpu_custom_call.1} parent=11 // pred_check_branch
          %268 = sbr.rel (%p266) target = $region20
        $region19: #{tpu_custom_call.1} parent=11 // pred_region
          %s270 = ssub.s32 1024, 1024
          %271 = vsyncadd [#allocation9], %s270
          %s272 = sshll.u32 [#allocation8], 4
          %s273 = int_to_ptr.vmem [resolvable:$true] %s272
          %278 = dma.hbm_to_vmem [thread:$0]  %s3, 1024, %s273, [#allocation9], 64, 64, 4
        $region20: #{tpu_custom_call.1} parent=11 // pred_fallthru
          _
        // Predicated region
        $region21: #{tpu_custom_call.1} parent=11 // pred_check
          %p279 = pneg %p144
        $region22: #{tpu_custom_call.1} parent=11 // pred_check_branch
          %281 = sbr.rel (%p279) target = $region24
        $region23: #{tpu_custom_call.1} parent=11 // pred_region
          %s283 = ssub.s32 2048, 2048
          %284 = vsyncadd [#allocation9], %s283
          %s285 = sshll.u32 [#allocation10], 4
          %s286 = int_to_ptr.vmem [resolvable:$true] %s285
          %291 = dma.hbm_to_vmem [thread:$0]  %s4, 2048, %s286, [#allocation9], 128, 128, 8
        $region24: #{tpu_custom_call.1} parent=11 // pred_fallthru
          _
        // Predicated region
        $region25: #{tpu_custom_call.1} parent=11 // pred_check
          %p292 = pneg %p165
        $region26: #{tpu_custom_call.1} parent=11 // pred_check_branch
          %294 = sbr.rel (%p292) target = $region28
        $region27: #{tpu_custom_call.1} parent=11 // pred_region
          %s296 = ssub.s32 2048, 2048
          %297 = vsyncadd [#allocation12], %s296
          %s298 = sshll.u32 [#allocation11], 4
          %s299 = int_to_ptr.vmem [resolvable:$true] %s298
          %304 = dma.hbm_to_vmem [thread:$0]  %s5, 2048, %s299, [#allocation12], 64, 64, 4
        $region28: #{tpu_custom_call.1} parent=11 // pred_fallthru
          _
        // Predicated region
        $region29: #{tpu_custom_call.1} parent=11 // pred_check
          %p305 = pneg %p186
        $region30: #{tpu_custom_call.1} parent=11 // pred_check_branch
          %307 = sbr.rel (%p305) target = $region32
        $region31: #{tpu_custom_call.1} parent=11 // pred_region
          %s309 = ssub.s32 16, 16
          %310 = vsyncadd [#allocation12], %s309
          %s312 = sshll.u32 [#allocation13], 4
          %s313 = int_to_ptr.vmem [resolvable:$true] %s312
          %315 = dma.hbm_to_vmem [thread:$0]  %s6, 16, %s313, [#allocation12]
        $region32: #{tpu_custom_call.1} parent=11 // pred_fallthru
          _
      $region12: #{tpu_custom_call.1} parent=5 // pred_fallthru
        _
      %p316 = scmp.lt.s32.totalorder %s29, 2
      // Predicated region
      $region33: #{tpu_custom_call.1} parent=5 // pred_check
        %p317 = pneg %p316
      $region34: #{tpu_custom_call.1} parent=5 // pred_check_branch
        %319 = sbr.rel (%p317) target = $region36
      $region35: #{tpu_custom_call.1} parent=5 // pred_region
        // Predicated region
        $region37: #{tpu_custom_call.1} parent=35 // pred_check
          %p320 = pneg %p49
        $region38: #{tpu_custom_call.1} parent=35 // pred_check_branch
          %322 = sbr.rel (%p320) target = $region40
        $region39: #{tpu_custom_call.1} parent=35 // pred_region
          %s323 = sand.u32 %s39, 1
          %s324 = scalar_lea.sflag [#allocation3], %s323
          %s325 = sand.u32 %s39, 1
          %s326 = smul.addr %s325, 8
          %s327 = scalar_lea.vmem [#allocation2], %s326
          %s329 = ssub.s32 128, 128
          %330 = vsyncadd %s324, %s329
          %s331 = smul.addr %s29, 128
          %s332 = scalar_lea.hbm %s0, %s331
          %s334 = sshll.u32 %s327, 4
          %s335 = int_to_ptr.vmem [resolvable:$true] %s334
          %337 = dma.hbm_to_vmem [thread:$0]  %s332, 128, %s335, %s324
        $region40: #{tpu_custom_call.1} parent=35 // pred_fallthru
          _
        // Predicated region
        $region41: #{tpu_custom_call.1} parent=35 // pred_check
          %p338 = pneg %p75
        $region42: #{tpu_custom_call.1} parent=35 // pred_check_branch
          %340 = sbr.rel (%p338) target = $region44
        $region43: #{tpu_custom_call.1} parent=35 // pred_region
          %s341 = sand.u32 %s29, 1
          %s342 = scalar_lea.sflag [#allocation6], %s341
          %s343 = sand.u32 %s65, 1
          %s344 = smul.addr %s343, 2
          %s345 = scalar_lea.vmem [#allocation5], %s344
          %s347 = ssub.s32 32, 32
          %348 = vsyncadd %s342, %s347
          %s349 = smul.addr %s29, 32
          %s350 = scalar_lea.hbm %s1, %s349
          %s352 = sshll.u32 %s345, 4
          %s353 = int_to_ptr.vmem [resolvable:$true] %s352
          %355 = dma.hbm_to_vmem [thread:$0]  %s350, 32, %s353, %s342
        $region44: #{tpu_custom_call.1} parent=35 // pred_fallthru
          _
      $region36: #{tpu_custom_call.1} parent=5 // pred_fallthru
        _
      %p356 = scmp.le.s32.totalorder 1, %s29
      %p357 = scmp.lt.s32.totalorder %s29, 3
      %p358 = pnand %p356, %p357
      %p359 = pneg %p358
      // Predicated region
      $region45: #{tpu_custom_call.1} parent=5 // pred_check
        _
      $region46: #{tpu_custom_call.1} parent=5 // pred_check_branch
        %361 = sbr.rel (%p358) target = $region48
      $region47: #{tpu_custom_call.1} parent=5 // pred_region
        %s362 = ssub.s32 %s29, 1
        %s363 = sand.u32 %s42, 1
        %s364 = scalar_lea.sflag [#allocation3], %s363
        %s365 = sand.u32 %s42, 1
        %s366 = smul.addr %s365, 8
        %s367 = scalar_lea.vmem [#allocation2], %s366
        // Predicated region
        $region49: #{tpu_custom_call.1} parent=47 // pred_check
          %p368 = pneg %p55
        $region50: #{tpu_custom_call.1} parent=47 // pred_check_branch
          %370 = sbr.rel (%p368) target = $region52
        $region51: #{tpu_custom_call.1} parent=47 // pred_region
          %371 = dma.done %s364, 128
        $region52: #{tpu_custom_call.1} parent=47 // pred_fallthru
          _
        %s372 = sand.u32 %s34, 1
        %s373 = scalar_lea.sflag [#allocation6], %s372
        %s374 = sand.u32 %s68, 1
        %s375 = smul.addr %s374, 2
        %s376 = scalar_lea.vmem [#allocation5], %s375
        // Predicated region
        $region53: #{tpu_custom_call.1} parent=47 // pred_check
          %p377 = pneg %p81
        $region54: #{tpu_custom_call.1} parent=47 // pred_check_branch
          %379 = sbr.rel (%p377) target = $region56
        $region55: #{tpu_custom_call.1} parent=47 // pred_region
          %380 = dma.done %s373, 32
        $region56: #{tpu_custom_call.1} parent=47 // pred_fallthru
          _
        // Predicated region
        $region57: #{tpu_custom_call.1} parent=47 // pred_check
          %p381 = pneg %p102
        $region58: #{tpu_custom_call.1} parent=47 // pred_check_branch
          %383 = sbr.rel (%p381) target = $region60
        $region59: #{tpu_custom_call.1} parent=47 // pred_region
          %384 = dma.done [#allocation6], 3072
        $region60: #{tpu_custom_call.1} parent=47 // pred_fallthru
          _
        // Predicated region
        $region61: #{tpu_custom_call.1} parent=47 // pred_check
          %p385 = pneg %p123
        $region62: #{tpu_custom_call.1} parent=47 // pred_check_branch
          %387 = sbr.rel (%p385) target = $region64
        $region63: #{tpu_custom_call.1} parent=47 // pred_region
          %388 = dma.done [#allocation9], 1024
        $region64: #{tpu_custom_call.1} parent=47 // pred_fallthru
          _
        // Predicated region
        $region65: #{tpu_custom_call.1} parent=47 // pred_check
          %p389 = pneg %p144
        $region66: #{tpu_custom_call.1} parent=47 // pred_check_branch
          %391 = sbr.rel (%p389) target = $region68
        $region67: #{tpu_custom_call.1} parent=47 // pred_region
          %392 = dma.done [#allocation9], 2048
        $region68: #{tpu_custom_call.1} parent=47 // pred_fallthru
          _
        // Predicated region
        $region69: #{tpu_custom_call.1} parent=47 // pred_check
          %p393 = pneg %p165
        $region70: #{tpu_custom_call.1} parent=47 // pred_check_branch
          %395 = sbr.rel (%p393) target = $region72
        $region71: #{tpu_custom_call.1} parent=47 // pred_region
          %396 = dma.done [#allocation12], 2048
        $region72: #{tpu_custom_call.1} parent=47 // pred_fallthru
          _
        // Predicated region
        $region73: #{tpu_custom_call.1} parent=47 // pred_check
          %p397 = pneg %p186
        $region74: #{tpu_custom_call.1} parent=47 // pred_check_branch
          %399 = sbr.rel (%p397) target = $region76
        $region75: #{tpu_custom_call.1} parent=47 // pred_region
          %400 = dma.done [#allocation12], 16
        $region76: #{tpu_custom_call.1} parent=47 // pred_fallthru
          _
        %s401 = sand.u32 %s42, 1
        %s402 = scalar_lea.sflag [#allocation3], %s401
        %s403 = sand.u32 %s42, 1
        %s404 = smul.addr %s403, 8
        %s405 = scalar_lea.vmem [#allocation2], %s404
        %p406 = pneg %p55
        %p407 = pneg %p52
        %s408 = sand.u32 %s34, 1
        %s409 = scalar_lea.sflag [#allocation6], %s408
        %s410 = sand.u32 %s68, 1
        %s411 = smul.addr %s410, 2
        %s412 = scalar_lea.vmem [#allocation5], %s411
        %p413 = pneg %p81
        %p414 = pneg %p78
        %p415 = pneg %p102
        %p416 = pneg %p99
        %p417 = pneg %p123
        %p418 = pneg %p120
        %p419 = pneg %p144
        %p420 = pneg %p141
        %p421 = pneg %p165
        %p422 = pneg %p162
        %p423 = pneg %p186
        %p424 = pneg %p183
        %p425 = pneg %p212
        %p426 = pneg %p209
        %s427 = sand.u32 %s199, 1
        %s428 = scalar_lea.sflag [#allocation4], %s427
        %s429 = sand.u32 %s199, 1
        %s430 = smul.addr %s429, 8
        %s431 = scalar_lea.vmem [#allocation14], %s430
        %p432 = pneg %p238
        %p433 = pneg %p235
        %s434 = sand.u32 %s225, 1
        %s435 = scalar_lea.sflag [#allocation16], %s434
        %s436 = sand.u32 %s225, 1
        %s437 = smul.addr %s436, 32
        %s438 = scalar_lea.vmem [#allocation15], %s437
        %v440 = vld [vmem:[%s367] sm:$0xff]
        %v441 = vpack.c.bf16 %v440, %v440
        %v442 = vld [vmem:[#allocation7] sm:$0xff]
        %v443 = vld [vmem:[#allocation7 + $0x8] sm:$0xf]
        %v444 = vld [vmem:[#allocation7 + $0xc] sm:$0xff]
        %v445 = vld [vmem:[#allocation7 + $0x14] sm:$0xf]
        %v446 = vld [vmem:[#allocation7 + $0x18] sm:$0xff]
        %v447 = vld [vmem:[#allocation7 + $0x20] sm:$0xf]
        %v448 = vld [vmem:[#allocation7 + $0x24] sm:$0xff]
        %v449 = vld [vmem:[#allocation7 + $0x2c] sm:$0xf]
        %v450 = vld [vmem:[#allocation7 + $0x30] sm:$0xff]
        %v451 = vld [vmem:[#allocation7 + $0x38] sm:$0xf]
        %v452 = vld [vmem:[#allocation7 + $0x3c] sm:$0xff]
        %v453 = vld [vmem:[#allocation7 + $0x44] sm:$0xf]
        %v454 = vld [vmem:[#allocation7 + $0x48] sm:$0xff]
        %v455 = vld [vmem:[#allocation7 + $0x50] sm:$0xf]
        %v456 = vld [vmem:[#allocation7 + $0x54] sm:$0xff]
        %v457 = vld [vmem:[#allocation7 + $0x5c] sm:$0xf]
        %v458 = vld [vmem:[#allocation7 + $0x60] sm:$0xff]
        %v459 = vld [vmem:[#allocation7 + $0x68] sm:$0xf]
        %v460 = vld [vmem:[#allocation7 + $0x6c] sm:$0xff]
        %v461 = vld [vmem:[#allocation7 + $0x74] sm:$0xf]
        %v462 = vld [vmem:[#allocation7 + $0x78] sm:$0xff]
        %v463 = vld [vmem:[#allocation7 + $0x80] sm:$0xf]
        %v464 = vld [vmem:[#allocation7 + $0x84] sm:$0xff]
        %v465 = vld [vmem:[#allocation7 + $0x8c] sm:$0xf]
        %v466 = vld [vmem:[#allocation7 + $0x90] sm:$0xff]
        %v467 = vld [vmem:[#allocation7 + $0x98] sm:$0xf]
        %v468 = vld [vmem:[#allocation7 + $0x9c] sm:$0xff]
        %v469 = vld [vmem:[#allocation7 + $0xa4] sm:$0xf]
        %v470 = vld [vmem:[#allocation7 + $0xa8] sm:$0xff]
        %v471 = vld [vmem:[#allocation7 + $0xb0] sm:$0xf]
        %v472 = vld [vmem:[#allocation7 + $0xb4] sm:$0xff]
        %v473 = vld [vmem:[#allocation7 + $0xbc] sm:$0xf]
        %v506 = vunpack.c.l.b16 %v442
        %v507 = vunpack.c.h.b16 %v442
        %v508 = vunpack.c.l.b16 %v443
        %v509 = vunpack.c.l.b16 %v444
        %v510 = vunpack.c.h.b16 %v444
        %v511 = vunpack.c.l.b16 %v445
        %v512 = vunpack.c.l.b16 %v446
        %v513 = vunpack.c.h.b16 %v446
        %v514 = vunpack.c.l.b16 %v447
        %v515 = vunpack.c.l.b16 %v448
        %v516 = vunpack.c.h.b16 %v448
        %v517 = vunpack.c.l.b16 %v449
        %v518 = vunpack.c.l.b16 %v450
        %v519 = vunpack.c.h.b16 %v450
        %v520 = vunpack.c.l.b16 %v451
        %v521 = vunpack.c.l.b16 %v452
        %v522 = vunpack.c.h.b16 %v452
        %v523 = vunpack.c.l.b16 %v453
        %v524 = vunpack.c.l.b16 %v454
        %v525 = vunpack.c.h.b16 %v454
        %v526 = vunpack.c.l.b16 %v455
        %v527 = vunpack.c.l.b16 %v456
        %v528 = vunpack.c.h.b16 %v456
        %v529 = vunpack.c.l.b16 %v457
        %v530 = vunpack.c.l.b16 %v458
        %v531 = vunpack.c.h.b16 %v458
        %v532 = vunpack.c.l.b16 %v459
        %v533 = vunpack.c.l.b16 %v460
        %v534 = vunpack.c.h.b16 %v460
        %v535 = vunpack.c.l.b16 %v461
        %v536 = vunpack.c.l.b16 %v462
        %v537 = vunpack.c.h.b16 %v462
        %v538 = vunpack.c.l.b16 %v463
        %v539 = vunpack.c.l.b16 %v464
        %v540 = vunpack.c.h.b16 %v464
        %v541 = vunpack.c.l.b16 %v465
        %v542 = vunpack.c.l.b16 %v466
        %v543 = vunpack.c.h.b16 %v466
        %v544 = vunpack.c.l.b16 %v467
        %v545 = vunpack.c.l.b16 %v468
        %v546 = vunpack.c.h.b16 %v468
        %v547 = vunpack.c.l.b16 %v469
        %v548 = vunpack.c.l.b16 %v470
        %v549 = vunpack.c.h.b16 %v470
        %v550 = vunpack.c.l.b16 %v471
        %v551 = vunpack.c.l.b16 %v472
        %v552 = vunpack.c.h.b16 %v472
        %v553 = vunpack.c.l.b16 %v473
        %v554 = vpack.c.b16 %v509, %v506
        %v555 = vpack.c.b16 %v510, %v507
        %v556 = vpack.c.b16 %v511, %v508
        %v557 = vpack.c.b16 %v515, %v512
        %v558 = vpack.c.b16 %v516, %v513
        %v559 = vpack.c.b16 %v517, %v514
        %v560 = vpack.c.b16 %v521, %v518
        %v561 = vpack.c.b16 %v522, %v519
        %v562 = vpack.c.b16 %v523, %v520
        %v563 = vpack.c.b16 %v527, %v524
        %v564 = vpack.c.b16 %v528, %v525
        %v565 = vpack.c.b16 %v529, %v526
        %v566 = vpack.c.b16 %v533, %v530
        %v567 = vpack.c.b16 %v534, %v531
        %v568 = vpack.c.b16 %v535, %v532
        %v569 = vpack.c.b16 %v539, %v536
        %v570 = vpack.c.b16 %v540, %v537
        %v571 = vpack.c.b16 %v541, %v538
        %v572 = vpack.c.b16 %v545, %v542
        %v573 = vpack.c.b16 %v546, %v543
        %v574 = vpack.c.b16 %v547, %v544
        %v575 = vpack.c.b16 %v551, %v548
        %v576 = vpack.c.b16 %v552, %v549
        %v577 = vpack.c.b16 %v553, %v550
        %602 = vmatprep.subr.bf16.mxu0 %v555
        %603 = vmatpush1.bf16.msra.mxu0 %v554
        %604 = vmatprep.subr.bf16.mxu0 %v558
        %605 = vmatpush1.bf16.msra.mxu0 %v557
        %606 = vmatprep.subr.bf16.mxu0 %v561
        %607 = vmatpush1.bf16.msra.mxu0 %v560
        %608 = vmatprep.subr.bf16.mxu0 %v564
        %609 = vmatpush1.bf16.msra.mxu0 %v563
        %610 = vmatprep.subr.bf16.mxu0 %v567
        %611 = vmatpush1.bf16.msra.mxu0 %v566
        %612 = vmatprep.subr.bf16.mxu0 %v570
        %613 = vmatpush1.bf16.msra.mxu0 %v569
        %614 = vmatprep.subr.bf16.mxu0 %v573
        %615 = vmatpush1.bf16.msra.mxu0 %v572
        %616 = vmatprep.subr.bf16.mxu0 %v576
        %617 = vmatpush1.bf16.msra.mxu0 %v575
        %618 = vmatprep.subr.bf16.mxu0 0
        %619 = vmatpush1.bf16.msra.mxu0 0
        %620 = vmatprep.subr.bf16.mxu0 0
        %621 = vmatpush1.bf16.msra.mxu0 0
        %622 = vmatprep.subr.bf16.mxu0 0
        %623 = vmatpush1.bf16.msra.mxu0 0
        %624 = vmatprep.subr.bf16.mxu0 0
        %625 = vmatpush1.bf16.msra.mxu0 0
        %626 = vmatprep.subr.bf16.mxu0 0
        %627 = vmatpush1.bf16.msra.mxu0 0
        %628 = vmatprep.subr.bf16.mxu0 0
        %629 = vmatpush1.bf16.msra.mxu0 0
        %630 = vmatprep.subr.bf16.mxu0 0
        %631 = vmatpush1.bf16.msra.mxu0 0
        %632 = vmatprep.subr.bf16.mxu0 0
        %633 = vmatpush1.bf16.msra.mxu0 0
        %634 = vmatprep.mubr.bf16.mxu0 0
        %635 = vmatmul.mubr.bf16.gmra.mrb[0].mxu0 %v441
        %v636 = vpop.f32.mrb[0].mxu0
        %v637 = vadd.f32 0.0, %v636
        %v638 = vpop.f32.mrb[0].mxu0
        %v639 = vadd.f32 0.0, %v638
        %v640 = vpop.f32.mrb[0].mxu0
        %v641 = vpop.f32.mrb[0].mxu0
        %642 = vdwg.mxu0
        %643 = vmatprep.subr.bf16.mxu0 0
        %644 = vmatpush1.bf16.msra.mxu0 %v556
        %645 = vmatprep.subr.bf16.mxu0 0
        %646 = vmatpush1.bf16.msra.mxu0 %v559
        %647 = vmatprep.subr.bf16.mxu0 0
        %648 = vmatpush1.bf16.msra.mxu0 %v562
        %649 = vmatprep.subr.bf16.mxu0 0
        %650 = vmatpush1.bf16.msra.mxu0 %v565
        %651 = vmatprep.subr.bf16.mxu0 0
        %652 = vmatpush1.bf16.msra.mxu0 %v568
        %653 = vmatprep.subr.bf16.mxu0 0
        %654 = vmatpush1.bf16.msra.mxu0 %v571
        %655 = vmatprep.subr.bf16.mxu0 0
        %656 = vmatpush1.bf16.msra.mxu0 %v574
        %657 = vmatprep.subr.bf16.mxu0 0
        %658 = vmatpush1.bf16.msra.mxu0 %v577
        %659 = vmatprep.subr.bf16.mxu0 0
        %660 = vmatpush1.bf16.msra.mxu0 0
        %661 = vmatprep.subr.bf16.mxu0 0
        %662 = vmatpush1.bf16.msra.mxu0 0
        %663 = vmatprep.subr.bf16.mxu0 0
        %664 = vmatpush1.bf16.msra.mxu0 0
        %665 = vmatprep.subr.bf16.mxu0 0
        %666 = vmatpush1.bf16.msra.mxu0 0
        %667 = vmatprep.subr.bf16.mxu0 0
        %668 = vmatpush1.bf16.msra.mxu0 0
        %669 = vmatprep.subr.bf16.mxu0 0
        %670 = vmatpush1.bf16.msra.mxu0 0
        %671 = vmatprep.subr.bf16.mxu0 0
        %672 = vmatpush1.bf16.msra.mxu0 0
        %673 = vmatprep.subr.bf16.mxu0 0
        %674 = vmatpush1.bf16.msra.mxu0 0
        %675 = vmatprep.mubr.bf16.mxu0 0
        %676 = vmatmul.mubr.bf16.gmra.mrb[0].mxu0 %v441
        %v677 = vpop.f32.mrb[0].mxu0
        %v678 = vadd.f32 0.0, %v677
        %v679 = vpop.f32.mrb[0].mxu0
        %v680 = vpop.f32.mrb[0].mxu0
        %v681 = vpop.f32.mrb[0].mxu0
        %682 = vdwg.mxu0
        %v683 = vpack.c.bf16 %v637, %v637
        %v684 = vpack.c.bf16 %v639, %v639
        %v685 = vpack.c.bf16 %v678, %v678
        %v686 = vld [vmem:[%s376] sm:$0x3]
        %v687 = vunpack.c.0.s8 %v686
        %v688 = vcvt.s32.f32 %v687
        %vm689 = vcmp.gt.f32.partialorder %v688, 0.0
        %vm690 = vcmask 261120
        %v692 = vsel %vm690, %v683, 0
        %v695 = vsel %vm690, %v684, 0
        %697 = vmatprep.subr.bf16.mxu0 0
        %698 = vmatpush1.bf16.xpose.msra.mxu0 %v695
        %699 = vmatprep.subr.bf16.mxu0 0
        %700 = vmatpush1.bf16.xpose.msra.mxu0 0
        %701 = vmatprep.subr.bf16.mxu0 0
        %702 = vmatpush1.bf16.xpose.msra.mxu0 0
        %703 = vmatprep.subr.bf16.mxu0 0
        %704 = vmatpush1.bf16.xpose.msra.mxu0 0
        %705 = vmatprep.subr.bf16.mxu0 0
        %706 = vmatpush1.bf16.xpose.msra.mxu0 0
        %707 = vmatprep.subr.bf16.mxu0 0
        %708 = vmatpush1.bf16.xpose.msra.mxu0 0
        %709 = vmatprep.subr.bf16.mxu0 0
        %710 = vmatpush1.bf16.xpose.msra.mxu0 0
        %711 = vmatprep.subr.bf16.mxu0 0
        %712 = vmatpush1.bf16.xpose.msra.mxu0 0
        %713 = vmatprep.subr.bf16.mxu0 0
        %714 = vmatpush1.bf16.xpose.msra.mxu0 0
        %715 = vmatprep.subr.bf16.mxu0 0
        %716 = vmatpush1.bf16.xpose.msra.mxu0 0
        %717 = vmatprep.subr.bf16.mxu0 0
        %718 = vmatpush1.bf16.xpose.msra.mxu0 0
        %719 = vmatprep.subr.bf16.mxu0 0
        %720 = vmatpush1.bf16.xpose.msra.mxu0 0
        %721 = vmatprep.subr.bf16.mxu0 0
        %722 = vmatpush1.bf16.xpose.msra.mxu0 0
        %723 = vmatprep.subr.bf16.mxu0 0
        %724 = vmatpush1.bf16.xpose.msra.mxu0 0
        %725 = vmatprep.subr.bf16.mxu0 0
        %726 = vmatpush1.bf16.xpose.msra.mxu0 0
        %727 = vmatprep.subr.bf16.mxu0 0
        %728 = vmatpush1.bf16.xpose.msra.mxu0 0
        %729 = vmatprep.mubr.bf16.mxu0 0
        %730 = vmatmul.mubr.bf16.gmra.mrb[0].mxu0 %v692
        %v731 = vpop.f32.mrb[0].mxu0
        %v732 = vadd.f32 0.0, %v731
        %v733 = vpop.f32.mrb[0].mxu0
        %v734 = vpop.f32.mrb[0].mxu0
        %v735 = vpop.f32.mrb[0].mxu0
        %736 = vdwg.mxu0
        %v737 = vsel %vm689, -1e+09, %v732
        %vm738 = vcmask 64512
        %v739 = vsel %vm738, %v737, -inf
        %740 = vmax.xlane.f32.xlu0 %v739
        %v741 = vpop.xlane.xlu0 %740
        %v742 = vsub.f32 %v737, %v741
        %v743 = vmul.f32 %v742, 1.442695
        %v744 = vpow.pop %v743
        %v745 = vsel %vm738, %v744, 0.0
        %746 = vadd.xlane.f32.xlu0 %v745
        %v747 = vpop.xlane.xlu0 %746
        %v748 = vrcp.pop %v747
        %v749 = vmul.f32 %v744, %v748
        %750 = vst.msk [vmem:[%s438] sm:$0xff] %vm738, %v749
        %v751 = vpack.c.bf16 %v749, %v749
        %v753 = vsel %vm738, %v751, 0
        %vm755 = vcmask 1043456
        %v757 = vsel %vm755, %v685, 0
        %759 = vmatprep.subr.bf16.mxu0 0
        %760 = vmatpush1.bf16.msra.mxu0 %v757
        %761 = vmatprep.subr.bf16.mxu0 0
        %762 = vmatpush1.bf16.msra.mxu0 0
        %763 = vmatprep.subr.bf16.mxu0 0
        %764 = vmatpush1.bf16.msra.mxu0 0
        %765 = vmatprep.subr.bf16.mxu0 0
        %766 = vmatpush1.bf16.msra.mxu0 0
        %767 = vmatprep.subr.bf16.mxu0 0
        %768 = vmatpush1.bf16.msra.mxu0 0
        %769 = vmatprep.subr.bf16.mxu0 0
        %770 = vmatpush1.bf16.msra.mxu0 0
        %771 = vmatprep.subr.bf16.mxu0 0
        %772 = vmatpush1.bf16.msra.mxu0 0
        %773 = vmatprep.subr.bf16.mxu0 0
        %774 = vmatpush1.bf16.msra.mxu0 0
        %775 = vmatprep.subr.bf16.mxu0 0
        %776 = vmatpush1.bf16.msra.mxu0 0
        %777 = vmatprep.subr.bf16.mxu0 0
        %778 = vmatpush1.bf16.msra.mxu0 0
        %779 = vmatprep.subr.bf16.mxu0 0
        %780 = vmatpush1.bf16.msra.mxu0 0
        %781 = vmatprep.subr.bf16.mxu0 0
        %782 = vmatpush1.bf16.msra.mxu0 0
        %783 = vmatprep.subr.bf16.mxu0 0
        %784 = vmatpush1.bf16.msra.mxu0 0
        %785 = vmatprep.subr.bf16.mxu0 0
        %786 = vmatpush1.bf16.msra.mxu0 0
        %787 = vmatprep.subr.bf16.mxu0 0
        %788 = vmatpush1.bf16.msra.mxu0 0
        %789 = vmatprep.subr.bf16.mxu0 0
        %790 = vmatpush1.bf16.msra.mxu0 0
        %791 = vmatprep.mubr.bf16.mxu0 0
        %792 = vmatmul.mubr.bf16.gmra.mrb[0].mxu0 %v753
        %v793 = vpop.f32.mrb[0].mxu0
        %v794 = vadd.f32 0.0, %v793
        %v795 = vpop.f32.mrb[0].mxu0
        %v796 = vpop.f32.mrb[0].mxu0
        %v797 = vpop.f32.mrb[0].mxu0
        %798 = vdwg.mxu0
        %800 = vrot.lane.b32.xlu0 %v683, 96
        %v801 = vpop.permute.xlu0 %800
        %803 = vrot.lane.b32.xlu0 %v684, 96
        %v804 = vpop.permute.xlu0 %803
        %v806 = vsel %vm690, %v801, 0
        %v809 = vsel %vm690, %v804, 0
        %811 = vmatprep.subr.bf16.mxu0 0
        %812 = vmatpush1.bf16.xpose.msra.mxu0 %v809
        %813 = vmatprep.subr.bf16.mxu0 0
        %814 = vmatpush1.bf16.xpose.msra.mxu0 0
        %815 = vmatprep.subr.bf16.mxu0 0
        %816 = vmatpush1.bf16.xpose.msra.mxu0 0
        %817 = vmatprep.subr.bf16.mxu0 0
        %818 = vmatpush1.bf16.xpose.msra.mxu0 0
        %819 = vmatprep.subr.bf16.mxu0 0
        %820 = vmatpush1.bf16.xpose.msra.mxu0 0
        %821 = vmatprep.subr.bf16.mxu0 0
        %822 = vmatpush1.bf16.xpose.msra.mxu0 0
        %823 = vmatprep.subr.bf16.mxu0 0
        %824 = vmatpush1.bf16.xpose.msra.mxu0 0
        %825 = vmatprep.subr.bf16.mxu0 0
        %826 = vmatpush1.bf16.xpose.msra.mxu0 0
        %827 = vmatprep.subr.bf16.mxu0 0
        %828 = vmatpush1.bf16.xpose.msra.mxu0 0
        %829 = vmatprep.subr.bf16.mxu0 0
        %830 = vmatpush1.bf16.xpose.msra.mxu0 0
        %831 = vmatprep.subr.bf16.mxu0 0
        %832 = vmatpush1.bf16.xpose.msra.mxu0 0
        %833 = vmatprep.subr.bf16.mxu0 0
        %834 = vmatpush1.bf16.xpose.msra.mxu0 0
        %835 = vmatprep.subr.bf16.mxu0 0
        %836 = vmatpush1.bf16.xpose.msra.mxu0 0
        %837 = vmatprep.subr.bf16.mxu0 0
        %838 = vmatpush1.bf16.xpose.msra.mxu0 0
        %839 = vmatprep.subr.bf16.mxu0 0
        %840 = vmatpush1.bf16.xpose.msra.mxu0 0
        %841 = vmatprep.subr.bf16.mxu0 0
        %842 = vmatpush1.bf16.xpose.msra.mxu0 0
        %843 = vmatprep.mubr.bf16.mxu0 0
        %844 = vmatmul.mubr.bf16.gmra.mrb[0].mxu0 %v806
        %v845 = vpop.f32.mrb[0].mxu0
        %v846 = vadd.f32 0.0, %v845
        %v847 = vpop.f32.mrb[0].mxu0
        %v848 = vpop.f32.mrb[0].mxu0
        %v849 = vpop.f32.mrb[0].mxu0
        %850 = vdwg.mxu0
        %v851 = vsel %vm689, -1e+09, %v846
        %v852 = vsel %vm738, %v851, -inf
        %853 = vmax.xlane.f32.xlu0 %v852
        %v854 = vpop.xlane.xlu0 %853
        %v855 = vsub.f32 %v851, %v854
        %v856 = vmul.f32 %v855, 1.442695
        %v857 = vpow.pop %v856
        %v858 = vsel %vm738, %v857, 0.0
        %859 = vadd.xlane.f32.xlu0 %v858
        %v860 = vpop.xlane.xlu0 %859
        %v861 = vrcp.pop %v860
        %v862 = vmul.f32 %v857, %v861
        %s863 = scalar_lea.vmem %s438, 8 [#allocation15]
        %864 = vst.msk [vmem:[%s863] sm:$0xff] %vm738, %v862
        %v865 = vpack.c.bf16 %v862, %v862
        %867 = vrot.lane.b32.xlu0 %v685, 96
        %v868 = vpop.permute.xlu0 %867
        %v870 = vsel %vm738, %v865, 0
        %v873 = vsel %vm755, %v868, 0
        %875 = vmatprep.subr.bf16.mxu0 0
        %876 = vmatpush1.bf16.msra.mxu0 %v873
        %877 = vmatprep.subr.bf16.mxu0 0
        %878 = vmatpush1.bf16.msra.mxu0 0
        %879 = vmatprep.subr.bf16.mxu0 0
        %880 = vmatpush1.bf16.msra.mxu0 0
        %881 = vmatprep.subr.bf16.mxu0 0
        %882 = vmatpush1.bf16.msra.mxu0 0
        %883 = vmatprep.subr.bf16.mxu0 0
        %884 = vmatpush1.bf16.msra.mxu0 0
        %885 = vmatprep.subr.bf16.mxu0 0
        %886 = vmatpush1.bf16.msra.mxu0 0
        %887 = vmatprep.subr.bf16.mxu0 0
        %888 = vmatpush1.bf16.msra.mxu0 0
        %889 = vmatprep.subr.bf16.mxu0 0
        %890 = vmatpush1.bf16.msra.mxu0 0
        %891 = vmatprep.subr.bf16.mxu0 0
        %892 = vmatpush1.bf16.msra.mxu0 0
        %893 = vmatprep.subr.bf16.mxu0 0
        %894 = vmatpush1.bf16.msra.mxu0 0
        %895 = vmatprep.subr.bf16.mxu0 0
        %896 = vmatpush1.bf16.msra.mxu0 0
        %897 = vmatprep.subr.bf16.mxu0 0
        %898 = vmatpush1.bf16.msra.mxu0 0
        %899 = vmatprep.subr.bf16.mxu0 0
        %900 = vmatpush1.bf16.msra.mxu0 0
        %901 = vmatprep.subr.bf16.mxu0 0
        %902 = vmatpush1.bf16.msra.mxu0 0
        %903 = vmatprep.subr.bf16.mxu0 0
        %904 = vmatpush1.bf16.msra.mxu0 0
        %905 = vmatprep.subr.bf16.mxu0 0
        %906 = vmatpush1.bf16.msra.mxu0 0
        %907 = vmatprep.mubr.bf16.mxu0 0
        %908 = vmatmul.mubr.bf16.gmra.mrb[0].mxu0 %v870
        %v909 = vpop.f32.mrb[0].mxu0
        %v910 = vadd.f32 0.0, %v909
        %v911 = vpop.f32.mrb[0].mxu0
        %v912 = vpop.f32.mrb[0].mxu0
        %v913 = vpop.f32.mrb[0].mxu0
        %914 = vdwg.mxu0
        %915 = vrot.lane.b32.xlu0 %v683, 64
        %v916 = vpop.permute.xlu0 %915
        %917 = vrot.lane.b32.xlu0 %v684, 64
        %v918 = vpop.permute.xlu0 %917
        %v920 = vsel %vm690, %v916, 0
        %v923 = vsel %vm690, %v918, 0
        %925 = vmatprep.subr.bf16.mxu0 0
        %926 = vmatpush1.bf16.xpose.msra.mxu0 %v923
        %927 = vmatprep.subr.bf16.mxu0 0
        %928 = vmatpush1.bf16.xpose.msra.mxu0 0
        %929 = vmatprep.subr.bf16.mxu0 0
        %930 = vmatpush1.bf16.xpose.msra.mxu0 0
        %931 = vmatprep.subr.bf16.mxu0 0
        %932 = vmatpush1.bf16.xpose.msra.mxu0 0
        %933 = vmatprep.subr.bf16.mxu0 0
        %934 = vmatpush1.bf16.xpose.msra.mxu0 0
        %935 = vmatprep.subr.bf16.mxu0 0
        %936 = vmatpush1.bf16.xpose.msra.mxu0 0
        %937 = vmatprep.subr.bf16.mxu0 0
        %938 = vmatpush1.bf16.xpose.msra.mxu0 0
        %939 = vmatprep.subr.bf16.mxu0 0
        %940 = vmatpush1.bf16.xpose.msra.mxu0 0
        %941 = vmatprep.subr.bf16.mxu0 0
        %942 = vmatpush1.bf16.xpose.msra.mxu0 0
        %943 = vmatprep.subr.bf16.mxu0 0
        %944 = vmatpush1.bf16.xpose.msra.mxu0 0
        %945 = vmatprep.subr.bf16.mxu0 0
        %946 = vmatpush1.bf16.xpose.msra.mxu0 0
        %947 = vmatprep.subr.bf16.mxu0 0
        %948 = vmatpush1.bf16.xpose.msra.mxu0 0
        %949 = vmatprep.subr.bf16.mxu0 0
        %950 = vmatpush1.bf16.xpose.msra.mxu0 0
        %951 = vmatprep.subr.bf16.mxu0 0
        %952 = vmatpush1.bf16.xpose.msra.mxu0 0
        %953 = vmatprep.subr.bf16.mxu0 0
        %954 = vmatpush1.bf16.xpose.msra.mxu0 0
        %955 = vmatprep.subr.bf16.mxu0 0
        %956 = vmatpush1.bf16.xpose.msra.mxu0 0
        %957 = vmatprep.mubr.bf16.mxu0 0
        %958 = vmatmul.mubr.bf16.gmra.mrb[0].mxu0 %v920
        %v959 = vpop.f32.mrb[0].mxu0
        %v960 = vadd.f32 0.0, %v959
        %v961 = vpop.f32.mrb[0].mxu0
        %v962 = vpop.f32.mrb[0].mxu0
        %v963 = vpop.f32.mrb[0].mxu0
        %964 = vdwg.mxu0
        %v965 = vsel %vm689, -1e+09, %v960
        %v966 = vsel %vm738, %v965, -inf
        %967 = vmax.xlane.f32.xlu0 %v966
        %v968 = vpop.xlane.xlu0 %967
        %v969 = vsub.f32 %v965, %v968
        %v970 = vmul.f32 %v969, 1.442695
        %v971 = vpow.pop %v970
        %v972 = vsel %vm738, %v971, 0.0
        %973 = vadd.xlane.f32.xlu0 %v972
        %v974 = vpop.xlane.xlu0 %973
        %v975 = vrcp.pop %v974
        %v976 = vmul.f32 %v971, %v975
        %s977 = scalar_lea.vmem %s438, 16 [#allocation15]
        %978 = vst.msk [vmem:[%s977] sm:$0xff] %vm738, %v976
        %v979 = vpack.c.bf16 %v976, %v976
        %980 = vrot.lane.b32.xlu0 %v685, 64
        %v981 = vpop.permute.xlu0 %980
        %v983 = vsel %vm738, %v979, 0
        %v986 = vsel %vm755, %v981, 0
        %988 = vmatprep.subr.bf16.mxu0 0
        %989 = vmatpush1.bf16.msra.mxu0 %v986
        %990 = vmatprep.subr.bf16.mxu0 0
        %991 = vmatpush1.bf16.msra.mxu0 0
        %992 = vmatprep.subr.bf16.mxu0 0
        %993 = vmatpush1.bf16.msra.mxu0 0
        %994 = vmatprep.subr.bf16.mxu0 0
        %995 = vmatpush1.bf16.msra.mxu0 0
        %996 = vmatprep.subr.bf16.mxu0 0
        %997 = vmatpush1.bf16.msra.mxu0 0
        %998 = vmatprep.subr.bf16.mxu0 0
        %999 = vmatpush1.bf16.msra.mxu0 0
        %1000 = vmatprep.subr.bf16.mxu0 0
        %1001 = vmatpush1.bf16.msra.mxu0 0
        %1002 = vmatprep.subr.bf16.mxu0 0
        %1003 = vmatpush1.bf16.msra.mxu0 0
        %1004 = vmatprep.subr.bf16.mxu0 0
        %1005 = vmatpush1.bf16.msra.mxu0 0
        %1006 = vmatprep.subr.bf16.mxu0 0
        %1007 = vmatpush1.bf16.msra.mxu0 0
        %1008 = vmatprep.subr.bf16.mxu0 0
        %1009 = vmatpush1.bf16.msra.mxu0 0
        %1010 = vmatprep.subr.bf16.mxu0 0
        %1011 = vmatpush1.bf16.msra.mxu0 0
        %1012 = vmatprep.subr.bf16.mxu0 0
        %1013 = vmatpush1.bf16.msra.mxu0 0
        %1014 = vmatprep.subr.bf16.mxu0 0
        %1015 = vmatpush1.bf16.msra.mxu0 0
        %1016 = vmatprep.subr.bf16.mxu0 0
        %1017 = vmatpush1.bf16.msra.mxu0 0
        %1018 = vmatprep.subr.bf16.mxu0 0
        %1019 = vmatpush1.bf16.msra.mxu0 0
        %1020 = vmatprep.mubr.bf16.mxu0 0
        %1021 = vmatmul.mubr.bf16.gmra.mrb[0].mxu0 %v983
        %v1022 = vpop.f32.mrb[0].mxu0
        %v1023 = vadd.f32 0.0, %v1022
        %v1024 = vpop.f32.mrb[0].mxu0
        %v1025 = vpop.f32.mrb[0].mxu0
        %v1026 = vpop.f32.mrb[0].mxu0
        %1027 = vdwg.mxu0
        %1028 = vrot.lane.b32.xlu0 %v683, 32
        %v1029 = vpop.permute.xlu0 %1028
        %1030 = vrot.lane.b32.xlu0 %v684, 32
        %v1031 = vpop.permute.xlu0 %1030
        %v1033 = vsel %vm690, %v1029, 0
        %v1036 = vsel %vm690, %v1031, 0
        %1038 = vmatprep.subr.bf16.mxu0 0
        %1039 = vmatpush1.bf16.xpose.msra.mxu0 %v1036
        %1040 = vmatprep.subr.bf16.mxu0 0
        %1041 = vmatpush1.bf16.xpose.msra.mxu0 0
        %1042 = vmatprep.subr.bf16.mxu0 0
        %1043 = vmatpush1.bf16.xpose.msra.mxu0 0
        %1044 = vmatprep.subr.bf16.mxu0 0
        %1045 = vmatpush1.bf16.xpose.msra.mxu0 0
        %1046 = vmatprep.subr.bf16.mxu0 0
        %1047 = vmatpush1.bf16.xpose.msra.mxu0 0
        %1048 = vmatprep.subr.bf16.mxu0 0
        %1049 = vmatpush1.bf16.xpose.msra.mxu0 0
        %1050 = vmatprep.subr.bf16.mxu0 0
        %1051 = vmatpush1.bf16.xpose.msra.mxu0 0
        %1052 = vmatprep.subr.bf16.mxu0 0
        %1053 = vmatpush1.bf16.xpose.msra.mxu0 0
        %1054 = vmatprep.subr.bf16.mxu0 0
        %1055 = vmatpush1.bf16.xpose.msra.mxu0 0
        %1056 = vmatprep.subr.bf16.mxu0 0
        %1057 = vmatpush1.bf16.xpose.msra.mxu0 0
        %1058 = vmatprep.subr.bf16.mxu0 0
        %1059 = vmatpush1.bf16.xpose.msra.mxu0 0
        %1060 = vmatprep.subr.bf16.mxu0 0
        %1061 = vmatpush1.bf16.xpose.msra.mxu0 0
        %1062 = vmatprep.subr.bf16.mxu0 0
        %1063 = vmatpush1.bf16.xpose.msra.mxu0 0
        %1064 = vmatprep.subr.bf16.mxu0 0
        %1065 = vmatpush1.bf16.xpose.msra.mxu0 0
        %1066 = vmatprep.subr.bf16.mxu0 0
        %1067 = vmatpush1.bf16.xpose.msra.mxu0 0
        %1068 = vmatprep.subr.bf16.mxu0 0
        %1069 = vmatpush1.bf16.xpose.msra.mxu0 0
        %1070 = vmatprep.mubr.bf16.mxu0 0
        %1071 = vmatmul.mubr.bf16.gmra.mrb[0].mxu0 %v1033
        %v1072 = vpop.f32.mrb[0].mxu0
        %v1073 = vadd.f32 0.0, %v1072
        %v1074 = vpop.f32.mrb[0].mxu0
        %v1075 = vpop.f32.mrb[0].mxu0
        %v1076 = vpop.f32.mrb[0].mxu0
        %1077 = vdwg.mxu0
        %v1078 = vsel %vm689, -1e+09, %v1073
        %v1079 = vsel %vm738, %v1078, -inf
        %1080 = vmax.xlane.f32.xlu0 %v1079
        %v1081 = vpop.xlane.xlu0 %1080
        %v1082 = vsub.f32 %v1078, %v1081
        %v1083 = vmul.f32 %v1082, 1.442695
        %v1084 = vpow.pop %v1083
        %v1085 = vsel %vm738, %v1084, 0.0
        %1086 = vadd.xlane.f32.xlu0 %v1085
        %v1087 = vpop.xlane.xlu0 %1086
        %v1088 = vrcp.pop %v1087
        %v1089 = vmul.f32 %v1084, %v1088
        %s1090 = scalar_lea.vmem %s438, 24 [#allocation15]
        %1091 = vst.msk [vmem:[%s1090] sm:$0xff] %vm738, %v1089
        %v1092 = vpack.c.bf16 %v1089, %v1089
        %1093 = vrot.lane.b32.xlu0 %v685, 32
        %v1094 = vpop.permute.xlu0 %1093
        %v1096 = vsel %vm738, %v1092, 0
        %v1099 = vsel %vm755, %v1094, 0
        %1101 = vmatprep.subr.bf16.mxu0 0
        %1102 = vmatpush1.bf16.msra.mxu0 %v1099
        %1103 = vmatprep.subr.bf16.mxu0 0
        %1104 = vmatpush1.bf16.msra.mxu0 0
        %1105 = vmatprep.subr.bf16.mxu0 0
        %1106 = vmatpush1.bf16.msra.mxu0 0
        %1107 = vmatprep.subr.bf16.mxu0 0
        %1108 = vmatpush1.bf16.msra.mxu0 0
        %1109 = vmatprep.subr.bf16.mxu0 0
        %1110 = vmatpush1.bf16.msra.mxu0 0
        %1111 = vmatprep.subr.bf16.mxu0 0
        %1112 = vmatpush1.bf16.msra.mxu0 0
        %1113 = vmatprep.subr.bf16.mxu0 0
        %1114 = vmatpush1.bf16.msra.mxu0 0
        %1115 = vmatprep.subr.bf16.mxu0 0
        %1116 = vmatpush1.bf16.msra.mxu0 0
        %1117 = vmatprep.subr.bf16.mxu0 0
        %1118 = vmatpush1.bf16.msra.mxu0 0
        %1119 = vmatprep.subr.bf16.mxu0 0
        %1120 = vmatpush1.bf16.msra.mxu0 0
        %1121 = vmatprep.subr.bf16.mxu0 0
        %1122 = vmatpush1.bf16.msra.mxu0 0
        %1123 = vmatprep.subr.bf16.mxu0 0
        %1124 = vmatpush1.bf16.msra.mxu0 0
        %1125 = vmatprep.subr.bf16.mxu0 0
        %1126 = vmatpush1.bf16.msra.mxu0 0
        %1127 = vmatprep.subr.bf16.mxu0 0
        %1128 = vmatpush1.bf16.msra.mxu0 0
        %1129 = vmatprep.subr.bf16.mxu0 0
        %1130 = vmatpush1.bf16.msra.mxu0 0
        %1131 = vmatprep.subr.bf16.mxu0 0
        %1132 = vmatpush1.bf16.msra.mxu0 0
        %1133 = vmatprep.mubr.bf16.mxu0 0
        %1134 = vmatmul.mubr.bf16.gmra.mrb[0].mxu0 %v1096
        %v1135 = vpop.f32.mrb[0].mxu0
        %v1136 = vadd.f32 0.0, %v1135
        %v1137 = vpop.f32.mrb[0].mxu0
        %v1138 = vpop.f32.mrb[0].mxu0
        %v1139 = vpop.f32.mrb[0].mxu0
        %1140 = vdwg.mxu0
        %1142 = vrot.lane.b32.xlu0 %v910, 32
        %v1143 = vpop.permute.xlu0 %1142
        %1146 = vrot.lane.b32.xlu0 %v1023, 64
        %v1147 = vpop.permute.xlu0 %1146
        %1150 = vrot.lane.b32.xlu0 %v1136, 96
        %v1151 = vpop.permute.xlu0 %1150
        %v1153 = vsel %vm690, %v794, %v1143
        %vm1154 = vcmask 523264
        %v1155 = vsel %vm1154, %v1153, %v1147
        %vm1156 = vcmask 785408
        %v1157 = vsel %vm1156, %v1155, %v1151
        %v1158 = vpack.c.bf16 %v1157, %v1157
        %v1159 = vld [vmem:[#allocation8] sm:$0xf]
        %v1160 = vld [vmem:[#allocation8 + $0x4] sm:$0xf]
        %v1161 = vld [vmem:[#allocation8 + $0x8] sm:$0xf]
        %v1162 = vld [vmem:[#allocation8 + $0xc] sm:$0xf]
        %v1163 = vld [vmem:[#allocation8 + $0x10] sm:$0xf]
        %v1164 = vld [vmem:[#allocation8 + $0x14] sm:$0xf]
        %v1165 = vld [vmem:[#allocation8 + $0x18] sm:$0xf]
        %v1166 = vld [vmem:[#allocation8 + $0x1c] sm:$0xf]
        %v1167 = vld [vmem:[#allocation8 + $0x20] sm:$0xf]
        %v1168 = vld [vmem:[#allocation8 + $0x24] sm:$0xf]
        %v1169 = vld [vmem:[#allocation8 + $0x28] sm:$0xf]
        %v1170 = vld [vmem:[#allocation8 + $0x2c] sm:$0xf]
        %v1171 = vld [vmem:[#allocation8 + $0x30] sm:$0xf]
        %v1172 = vld [vmem:[#allocation8 + $0x34] sm:$0xf]
        %v1173 = vld [vmem:[#allocation8 + $0x38] sm:$0xf]
        %v1174 = vld [vmem:[#allocation8 + $0x3c] sm:$0xf]
        %v1191 = vunpack.c.l.b16 %v1159
        %v1192 = vunpack.c.l.b16 %v1160
        %v1193 = vunpack.c.l.b16 %v1161
        %v1194 = vunpack.c.l.b16 %v1162
        %v1195 = vunpack.c.l.b16 %v1163
        %v1196 = vunpack.c.l.b16 %v1164
        %v1197 = vunpack.c.l.b16 %v1165
        %v1198 = vunpack.c.l.b16 %v1166
        %v1199 = vunpack.c.l.b16 %v1167
        %v1200 = vunpack.c.l.b16 %v1168
        %v1201 = vunpack.c.l.b16 %v1169
        %v1202 = vunpack.c.l.b16 %v1170
        %v1203 = vunpack.c.l.b16 %v1171
        %v1204 = vunpack.c.l.b16 %v1172
        %v1205 = vunpack.c.l.b16 %v1173
        %v1206 = vunpack.c.l.b16 %v1174
        %v1207 = vpack.c.b16 %v1192, %v1191
        %v1208 = vpack.c.b16 %v1194, %v1193
        %v1209 = vpack.c.b16 %v1196, %v1195
        %v1210 = vpack.c.b16 %v1198, %v1197
        %v1211 = vpack.c.b16 %v1200, %v1199
        %v1212 = vpack.c.b16 %v1202, %v1201
        %v1213 = vpack.c.b16 %v1204, %v1203
        %v1214 = vpack.c.b16 %v1206, %v1205
        %1223 = vmatprep.subr.bf16.mxu0 0
        %1224 = vmatpush1.bf16.msra.mxu0 %v1207
        %1225 = vmatprep.subr.bf16.mxu0 0
        %1226 = vmatpush1.bf16.msra.mxu0 %v1208
        %1227 = vmatprep.subr.bf16.mxu0 0
        %1228 = vmatpush1.bf16.msra.mxu0 %v1209
        %1229 = vmatprep.subr.bf16.mxu0 0
        %1230 = vmatpush1.bf16.msra.mxu0 %v1210
        %1231 = vmatprep.subr.bf16.mxu0 0
        %1232 = vmatpush1.bf16.msra.mxu0 %v1211
        %1233 = vmatprep.subr.bf16.mxu0 0
        %1234 = vmatpush1.bf16.msra.mxu0 %v1212
        %1235 = vmatprep.subr.bf16.mxu0 0
        %1236 = vmatpush1.bf16.msra.mxu0 %v1213
        %1237 = vmatprep.subr.bf16.mxu0 0
        %1238 = vmatpush1.bf16.msra.mxu0 %v1214
        %1239 = vmatprep.subr.bf16.mxu0 0
        %1240 = vmatpush1.bf16.msra.mxu0 0
        %1241 = vmatprep.subr.bf16.mxu0 0
        %1242 = vmatpush1.bf16.msra.mxu0 0
        %1243 = vmatprep.subr.bf16.mxu0 0
        %1244 = vmatpush1.bf16.msra.mxu0 0
        %1245 = vmatprep.subr.bf16.mxu0 0
        %1246 = vmatpush1.bf16.msra.mxu0 0
        %1247 = vmatprep.subr.bf16.mxu0 0
        %1248 = vmatpush1.bf16.msra.mxu0 0
        %1249 = vmatprep.subr.bf16.mxu0 0
        %1250 = vmatpush1.bf16.msra.mxu0 0
        %1251 = vmatprep.subr.bf16.mxu0 0
        %1252 = vmatpush1.bf16.msra.mxu0 0
        %1253 = vmatprep.subr.bf16.mxu0 0
        %1254 = vmatpush1.bf16.msra.mxu0 0
        %1255 = vmatprep.mubr.bf16.mxu0 0
        %1256 = vmatmul.mubr.bf16.gmra.mrb[0].mxu0 %v1158
        %v1257 = vpop.f32.mrb[0].mxu0
        %v1258 = vadd.f32 %v440, %v1257
        %v1259 = vpop.f32.mrb[0].mxu0
        %v1260 = vpop.f32.mrb[0].mxu0
        %v1261 = vpop.f32.mrb[0].mxu0
        %1262 = vdwg.mxu0
        %1263 = vadd.xlane.f32.xlu0 %v1258
        %v1264 = vpop.xlane.xlu0 %1263
        %v1265 = vrcp.pop 128.0
        %v1266 = vmul.f32 %v1264, %v1265
        %v1267 = vmul.f32 %v1258, %v1258
        %1268 = vadd.xlane.f32.xlu0 %v1267
        %v1269 = vpop.xlane.xlu0 %1268
        %v1270 = vmul.f32 %v1269, %v1265
        %v1271 = vmul.f32 %v1266, %v1266
        %v1272 = vsub.f32 %v1270, %v1271
        %v1273 = vmax.f32 %v1272, 0.0
        %v1274 = vsub.f32 %v1258, %v1266
        %v1275 = vadd.f32 %v1273, 1e-05
        %v1276 = vrsqrt.pop %v1275
        %v1277 = vmul.f32 %v1274, %v1276
        %v1278 = vpack.c.bf16 %v1277, %v1277
        %v1279 = vld [vmem:[#allocation10] sm:$0xff]
        %v1280 = vld [vmem:[#allocation10 + $0x8] sm:$0xff]
        %v1281 = vld [vmem:[#allocation10 + $0x10] sm:$0xff]
        %v1282 = vld [vmem:[#allocation10 + $0x18] sm:$0xff]
        %v1283 = vld [vmem:[#allocation10 + $0x20] sm:$0xff]
        %v1284 = vld [vmem:[#allocation10 + $0x28] sm:$0xff]
        %v1285 = vld [vmem:[#allocation10 + $0x30] sm:$0xff]
        %v1286 = vld [vmem:[#allocation10 + $0x38] sm:$0xff]
        %v1287 = vld [vmem:[#allocation10 + $0x40] sm:$0xff]
        %v1288 = vld [vmem:[#allocation10 + $0x48] sm:$0xff]
        %v1289 = vld [vmem:[#allocation10 + $0x50] sm:$0xff]
        %v1290 = vld [vmem:[#allocation10 + $0x58] sm:$0xff]
        %v1291 = vld [vmem:[#allocation10 + $0x60] sm:$0xff]
        %v1292 = vld [vmem:[#allocation10 + $0x68] sm:$0xff]
        %v1293 = vld [vmem:[#allocation10 + $0x70] sm:$0xff]
        %v1294 = vld [vmem:[#allocation10 + $0x78] sm:$0xff]
        %v1311 = vunpack.c.l.b16 %v1279
        %v1312 = vunpack.c.h.b16 %v1279
        %v1313 = vunpack.c.l.b16 %v1280
        %v1314 = vunpack.c.h.b16 %v1280
        %v1315 = vunpack.c.l.b16 %v1281
        %v1316 = vunpack.c.h.b16 %v1281
        %v1317 = vunpack.c.l.b16 %v1282
        %v1318 = vunpack.c.h.b16 %v1282
        %v1319 = vunpack.c.l.b16 %v1283
        %v1320 = vunpack.c.h.b16 %v1283
        %v1321 = vunpack.c.l.b16 %v1284
        %v1322 = vunpack.c.h.b16 %v1284
        %v1323 = vunpack.c.l.b16 %v1285
        %v1324 = vunpack.c.h.b16 %v1285
        %v1325 = vunpack.c.l.b16 %v1286
        %v1326 = vunpack.c.h.b16 %v1286
        %v1327 = vunpack.c.l.b16 %v1287
        %v1328 = vunpack.c.h.b16 %v1287
        %v1329 = vunpack.c.l.b16 %v1288
        %v1330 = vunpack.c.h.b16 %v1288
        %v1331 = vunpack.c.l.b16 %v1289
        %v1332 = vunpack.c.h.b16 %v1289
        %v1333 = vunpack.c.l.b16 %v1290
        %v1334 = vunpack.c.h.b16 %v1290
        %v1335 = vunpack.c.l.b16 %v1291
        %v1336 = vunpack.c.h.b16 %v1291
        %v1337 = vunpack.c.l.b16 %v1292
        %v1338 = vunpack.c.h.b16 %v1292
        %v1339 = vunpack.c.l.b16 %v1293
        %v1340 = vunpack.c.h.b16 %v1293
        %v1341 = vunpack.c.l.b16 %v1294
        %v1342 = vunpack.c.h.b16 %v1294
        %v1343 = vpack.c.b16 %v1313, %v1311
        %v1344 = vpack.c.b16 %v1314, %v1312
        %v1345 = vpack.c.b16 %v1317, %v1315
        %v1346 = vpack.c.b16 %v1318, %v1316
        %v1347 = vpack.c.b16 %v1321, %v1319
        %v1348 = vpack.c.b16 %v1322, %v1320
        %v1349 = vpack.c.b16 %v1325, %v1323
        %v1350 = vpack.c.b16 %v1326, %v1324
        %v1351 = vpack.c.b16 %v1329, %v1327
        %v1352 = vpack.c.b16 %v1330, %v1328
        %v1353 = vpack.c.b16 %v1333, %v1331
        %v1354 = vpack.c.b16 %v1334, %v1332
        %v1355 = vpack.c.b16 %v1337, %v1335
        %v1356 = vpack.c.b16 %v1338, %v1336
        %v1357 = vpack.c.b16 %v1341, %v1339
        %v1358 = vpack.c.b16 %v1342, %v1340
        %1375 = vmatprep.subr.bf16.mxu0 %v1344
        %1376 = vmatpush1.bf16.msra.mxu0 %v1343
        %1377 = vmatprep.subr.bf16.mxu0 %v1346
        %1378 = vmatpush1.bf16.msra.mxu0 %v1345
        %1379 = vmatprep.subr.bf16.mxu0 %v1348
        %1380 = vmatpush1.bf16.msra.mxu0 %v1347
        %1381 = vmatprep.subr.bf16.mxu0 %v1350
        %1382 = vmatpush1.bf16.msra.mxu0 %v1349
        %1383 = vmatprep.subr.bf16.mxu0 %v1352
        %1384 = vmatpush1.bf16.msra.mxu0 %v1351
        %1385 = vmatprep.subr.bf16.mxu0 %v1354
        %1386 = vmatpush1.bf16.msra.mxu0 %v1353
        %1387 = vmatprep.subr.bf16.mxu0 %v1356
        %1388 = vmatpush1.bf16.msra.mxu0 %v1355
        %1389 = vmatprep.subr.bf16.mxu0 %v1358
        %1390 = vmatpush1.bf16.msra.mxu0 %v1357
        %1391 = vmatprep.subr.bf16.mxu0 0
        %1392 = vmatpush1.bf16.msra.mxu0 0
        %1393 = vmatprep.subr.bf16.mxu0 0
        %1394 = vmatpush1.bf16.msra.mxu0 0
        %1395 = vmatprep.subr.bf16.mxu0 0
        %1396 = vmatpush1.bf16.msra.mxu0 0
        %1397 = vmatprep.subr.bf16.mxu0 0
        %1398 = vmatpush1.bf16.msra.mxu0 0
        %1399 = vmatprep.subr.bf16.mxu0 0
        %1400 = vmatpush1.bf16.msra.mxu0 0
        %1401 = vmatprep.subr.bf16.mxu0 0
        %1402 = vmatpush1.bf16.msra.mxu0 0
        %1403 = vmatprep.subr.bf16.mxu0 0
        %1404 = vmatpush1.bf16.msra.mxu0 0
        %1405 = vmatprep.subr.bf16.mxu0 0
        %1406 = vmatpush1.bf16.msra.mxu0 0
        %1407 = vmatprep.mubr.bf16.mxu0 0
        %1408 = vmatmul.mubr.bf16.gmra.mrb[0].mxu0 %v1278
        %v1409 = vpop.f32.mrb[0].mxu0
        %v1410 = vadd.f32 0.0, %v1409
        %v1411 = vpop.f32.mrb[0].mxu0
        %v1412 = vadd.f32 0.0, %v1411
        %v1413 = vpop.f32.mrb[0].mxu0
        %v1414 = vpop.f32.mrb[0].mxu0
        %1415 = vdwg.mxu0
        %v1416 = vmul.f32 %v1410, 0.5
        %v1417 = vmul.f32 %v1412, 0.5
        %v1418 = vmul.f32 %v1410, 0.70710677
        %v1419 = vmul.f32 %v1412, 0.70710677
        %v1420 = verf.f32.pop %v1418
        %v1421 = verf.f32.pop %v1419
        %v1422 = vadd.f32 %v1420, 1.0
        %v1423 = vadd.f32 %v1421, 1.0
        %v1424 = vmul.f32 %v1416, %v1422
        %v1425 = vmul.f32 %v1417, %v1423
        %v1426 = vpack.c.bf16 %v1424, %v1424
        %v1427 = vpack.c.bf16 %v1425, %v1425
        %v1428 = vld [vmem:[#allocation11] sm:$0xf]
        %v1429 = vld [vmem:[#allocation11 + $0x4] sm:$0xf]
        %v1430 = vld [vmem:[#allocation11 + $0x8] sm:$0xf]
        %v1431 = vld [vmem:[#allocation11 + $0xc] sm:$0xf]
        %v1432 = vld [vmem:[#allocation11 + $0x10] sm:$0xf]
        %v1433 = vld [vmem:[#allocation11 + $0x14] sm:$0xf]
        %v1434 = vld [vmem:[#allocation11 + $0x18] sm:$0xf]
        %v1435 = vld [vmem:[#allocation11 + $0x1c] sm:$0xf]
        %v1436 = vld [vmem:[#allocation11 + $0x20] sm:$0xf]
        %v1437 = vld [vmem:[#allocation11 + $0x24] sm:$0xf]
        %v1438 = vld [vmem:[#allocation11 + $0x28] sm:$0xf]
        %v1439 = vld [vmem:[#allocation11 + $0x2c] sm:$0xf]
        %v1440 = vld [vmem:[#allocation11 + $0x30] sm:$0xf]
        %v1441 = vld [vmem:[#allocation11 + $0x34] sm:$0xf]
        %v1442 = vld [vmem:[#allocation11 + $0x38] sm:$0xf]
        %v1443 = vld [vmem:[#allocation11 + $0x3c] sm:$0xf]
        %v1444 = vld [vmem:[#allocation11 + $0x40] sm:$0xf]
        %v1445 = vld [vmem:[#allocation11 + $0x44] sm:$0xf]
        %v1446 = vld [vmem:[#allocation11 + $0x48] sm:$0xf]
        %v1447 = vld [vmem:[#allocation11 + $0x4c] sm:$0xf]
        %v1448 = vld [vmem:[#allocation11 + $0x50] sm:$0xf]
        %v1449 = vld [vmem:[#allocation11 + $0x54] sm:$0xf]
        %v1450 = vld [vmem:[#allocation11 + $0x58] sm:$0xf]
        %v1451 = vld [vmem:[#allocation11 + $0x5c] sm:$0xf]
        %v1452 = vld [vmem:[#allocation11 + $0x60] sm:$0xf]
        %v1453 = vld [vmem:[#allocation11 + $0x64] sm:$0xf]
        %v1454 = vld [vmem:[#allocation11 + $0x68] sm:$0xf]
        %v1455 = vld [vmem:[#allocation11 + $0x6c] sm:$0xf]
        %v1456 = vld [vmem:[#allocation11 + $0x70] sm:$0xf]
        %v1457 = vld [vmem:[#allocation11 + $0x74] sm:$0xf]
        %v1458 = vld [vmem:[#allocation11 + $0x78] sm:$0xf]
        %v1459 = vld [vmem:[#allocation11 + $0x7c] sm:$0xf]
        %v1460 = vld [vmem:[#allocation13] sm:$0x1]
        %v1462 = vlaneseq
        %v1463 = vshrl.u32 %v1462, 7
        %v1464 = vsub.s32 0, %v1463
        %v1465 = vrot.slane %v1460, %v1464
        %v1499 = vunpack.c.l.b16 %v1428
        %v1500 = vunpack.c.l.b16 %v1429
        %v1501 = vunpack.c.l.b16 %v1430
        %v1502 = vunpack.c.l.b16 %v1431
        %v1503 = vunpack.c.l.b16 %v1432
        %v1504 = vunpack.c.l.b16 %v1433
        %v1505 = vunpack.c.l.b16 %v1434
        %v1506 = vunpack.c.l.b16 %v1435
        %v1507 = vunpack.c.l.b16 %v1436
        %v1508 = vunpack.c.l.b16 %v1437
        %v1509 = vunpack.c.l.b16 %v1438
        %v1510 = vunpack.c.l.b16 %v1439
        %v1511 = vunpack.c.l.b16 %v1440
        %v1512 = vunpack.c.l.b16 %v1441
        %v1513 = vunpack.c.l.b16 %v1442
        %v1514 = vunpack.c.l.b16 %v1443
        %v1515 = vunpack.c.l.b16 %v1444
        %v1516 = vunpack.c.l.b16 %v1445
        %v1517 = vunpack.c.l.b16 %v1446
        %v1518 = vunpack.c.l.b16 %v1447
        %v1519 = vunpack.c.l.b16 %v1448
        %v1520 = vunpack.c.l.b16 %v1449
        %v1521 = vunpack.c.l.b16 %v1450
        %v1522 = vunpack.c.l.b16 %v1451
        %v1523 = vunpack.c.l.b16 %v1452
        %v1524 = vunpack.c.l.b16 %v1453
        %v1525 = vunpack.c.l.b16 %v1454
        %v1526 = vunpack.c.l.b16 %v1455
        %v1527 = vunpack.c.l.b16 %v1456
        %v1528 = vunpack.c.l.b16 %v1457
        %v1529 = vunpack.c.l.b16 %v1458
        %v1530 = vunpack.c.l.b16 %v1459
        %v1531 = vpack.c.b16 %v1500, %v1499
        %v1532 = vpack.c.b16 %v1502, %v1501
        %v1533 = vpack.c.b16 %v1504, %v1503
        %v1534 = vpack.c.b16 %v1506, %v1505
        %v1535 = vpack.c.b16 %v1508, %v1507
        %v1536 = vpack.c.b16 %v1510, %v1509
        %v1537 = vpack.c.b16 %v1512, %v1511
        %v1538 = vpack.c.b16 %v1514, %v1513
        %v1539 = vpack.c.b16 %v1516, %v1515
        %v1540 = vpack.c.b16 %v1518, %v1517
        %v1541 = vpack.c.b16 %v1520, %v1519
        %v1542 = vpack.c.b16 %v1522, %v1521
        %v1543 = vpack.c.b16 %v1524, %v1523
        %v1544 = vpack.c.b16 %v1526, %v1525
        %v1545 = vpack.c.b16 %v1528, %v1527
        %v1546 = vpack.c.b16 %v1530, %v1529
        %1563 = vmatprep.subr.bf16.mxu0 0
        %1564 = vmatpush1.bf16.msra.mxu0 %v1531
        %1565 = vmatprep.subr.bf16.mxu0 0
        %1566 = vmatpush1.bf16.msra.mxu0 %v1532
        %1567 = vmatprep.subr.bf16.mxu0 0
        %1568 = vmatpush1.bf16.msra.mxu0 %v1533
        %1569 = vmatprep.subr.bf16.mxu0 0
        %1570 = vmatpush1.bf16.msra.mxu0 %v1534
        %1571 = vmatprep.subr.bf16.mxu0 0
        %1572 = vmatpush1.bf16.msra.mxu0 %v1535
        %1573 = vmatprep.subr.bf16.mxu0 0
        %1574 = vmatpush1.bf16.msra.mxu0 %v1536
        %1575 = vmatprep.subr.bf16.mxu0 0
        %1576 = vmatpush1.bf16.msra.mxu0 %v1537
        %1577 = vmatprep.subr.bf16.mxu0 0
        %1578 = vmatpush1.bf16.msra.mxu0 %v1538
        %1579 = vmatprep.subr.bf16.mxu0 0
        %1580 = vmatpush1.bf16.msra.mxu0 %v1539
        %1581 = vmatprep.subr.bf16.mxu0 0
        %1582 = vmatpush1.bf16.msra.mxu0 %v1540
        %1583 = vmatprep.subr.bf16.mxu0 0
        %1584 = vmatpush1.bf16.msra.mxu0 %v1541
        %1585 = vmatprep.subr.bf16.mxu0 0
        %1586 = vmatpush1.bf16.msra.mxu0 %v1542
        %1587 = vmatprep.subr.bf16.mxu0 0
        %1588 = vmatpush1.bf16.msra.mxu0 %v1543
        %1589 = vmatprep.subr.bf16.mxu0 0
        %1590 = vmatpush1.bf16.msra.mxu0 %v1544
        %1591 = vmatprep.subr.bf16.mxu0 0
        %1592 = vmatpush1.bf16.msra.mxu0 %v1545
        %1593 = vmatprep.subr.bf16.mxu0 0
        %1594 = vmatpush1.bf16.msra.mxu0 %v1546
        %1595 = vmatprep.mubr.bf16.mxu0 %v1427
        %1596 = vmatmul.mubr.bf16.gmra.mrb[0].mxu0 %v1426
        %v1597 = vpop.f32.mrb[0].mxu0
        %v1598 = vadd.f32 %v1465, %v1597
        %v1599 = vpop.f32.mrb[0].mxu0
        %v1600 = vpop.f32.mrb[0].mxu0
        %v1601 = vpop.f32.mrb[0].mxu0
        %1602 = vdwg.mxu0
        %v1603 = vadd.f32 %v1598, %v1277
        %1604 = vadd.xlane.f32.xlu0 %v1603
        %v1605 = vpop.xlane.xlu0 %1604
        %v1606 = vmul.f32 %v1605, %v1265
        %v1607 = vmul.f32 %v1603, %v1603
        %1608 = vadd.xlane.f32.xlu0 %v1607
        %v1609 = vpop.xlane.xlu0 %1608
        %v1610 = vmul.f32 %v1609, %v1265
        %v1611 = vmul.f32 %v1606, %v1606
        %v1612 = vsub.f32 %v1610, %v1611
        %v1613 = vmax.f32 %v1612, 0.0
        %v1614 = vsub.f32 %v1603, %v1606
        %v1615 = vadd.f32 %v1613, 1e-05
        %v1616 = vrsqrt.pop %v1615
        %v1617 = vmul.f32 %v1614, %v1616
        %1618 = vst [vmem:[%s431] sm:$0xff] %v1617
        %s1619 = sand.u32 %s199, 1
        %s1620 = scalar_lea.sflag [#allocation4], %s1619
        %s1621 = sand.u32 %s199, 1
        %s1622 = smul.addr %s1621, 8
        %s1623 = scalar_lea.vmem [#allocation14], %s1622
        %s1624 = sand.u32 %s225, 1
        %s1625 = scalar_lea.sflag [#allocation16], %s1624
        %s1626 = sand.u32 %s225, 1
        %s1627 = smul.addr %s1626, 32
        %s1628 = scalar_lea.vmem [#allocation15], %s1627
        // Predicated region
        $region77: #{tpu_custom_call.1} parent=47 // pred_check
          %p1629 = pneg %p209
        $region78: #{tpu_custom_call.1} parent=47 // pred_check_branch
          %1631 = sbr.rel (%p1629) target = $region80
        $region79: #{tpu_custom_call.1} parent=47 // pred_region
          %s1633 = ssub.s32 128, 128
          %1634 = vsyncadd %s1620, %s1633
          %s1635 = smul.addr %s34, 128
          %s1636 = scalar_lea.hbm %s7, %s1635
          %s1638 = sshll.u32 %s1623, 4
          %s1639 = int_to_ptr.vmem [resolvable:$true] %s1638
          %1641 = dma.vmem_to_hbm [thread:$0]  %s1639, 128, %s1636, %s1620
        $region80: #{tpu_custom_call.1} parent=47 // pred_fallthru
          _
        // Predicated region
        $region81: #{tpu_custom_call.1} parent=47 // pred_check
          %p1642 = pneg %p235
        $region82: #{tpu_custom_call.1} parent=47 // pred_check_branch
          %1644 = sbr.rel (%p1642) target = $region84
        $region83: #{tpu_custom_call.1} parent=47 // pred_region
          %s1646 = ssub.s32 512, 512
          %1647 = vsyncadd %s1625, %s1646
          %s1648 = smul.addr %s34, 4
          %s1649 = smul.addr %s1648, 128
          %s1650 = scalar_lea.hbm %s8, %s1649
          %s1651 = sshll.u32 %s1628, 4
          %s1652 = int_to_ptr.vmem [resolvable:$true] %s1651
          %1657 = dma.vmem_to_hbm [thread:$0]  %s1652, 512, %s1650, %s1625, 128, 128, 8
        $region84: #{tpu_custom_call.1} parent=47 // pred_fallthru
          _
      $region48: #{tpu_custom_call.1} parent=5 // pred_fallthru
        _
      %p1658 = scmp.le.s32.totalorder 2, %s29
      // Predicated region
      $region85: #{tpu_custom_call.1} parent=5 // pred_check
        %p1659 = pneg %p1658
      $region86: #{tpu_custom_call.1} parent=5 // pred_check_branch
        %1661 = sbr.rel (%p1659) target = $region88
      $region87: #{tpu_custom_call.1} parent=5 // pred_region
        %s1662 = ssub.s32 %s29, 2
        // Predicated region
        $region89: #{tpu_custom_call.1} parent=87 // pred_check
          %p1663 = pneg %p215
        $region90: #{tpu_custom_call.1} parent=87 // pred_check_branch
          %1665 = sbr.rel (%p1663) target = $region92
        $region91: #{tpu_custom_call.1} parent=87 // pred_region
          %s1666 = sand.u32 %s200, 1
          %s1667 = scalar_lea.sflag [#allocation4], %s1666
          %s1668 = sand.u32 %s200, 1
          %s1669 = smul.addr %s1668, 8
          %s1670 = scalar_lea.vmem [#allocation14], %s1669
          %1671 = dma.done %s1667, 128
        $region92: #{tpu_custom_call.1} parent=87 // pred_fallthru
          _
        // Predicated region
        $region93: #{tpu_custom_call.1} parent=87 // pred_check
          %p1672 = pneg %p241
        $region94: #{tpu_custom_call.1} parent=87 // pred_check_branch
          %1674 = sbr.rel (%p1672) target = $region96
        $region95: #{tpu_custom_call.1} parent=87 // pred_region
          %s1675 = sand.u32 %s226, 1
          %s1676 = scalar_lea.sflag [#allocation16], %s1675
          %s1677 = sand.u32 %s226, 1
          %s1678 = smul.addr %s1677, 32
          %s1679 = scalar_lea.vmem [#allocation15], %s1678
          %1680 = dma.done %s1676, 512
        $region96: #{tpu_custom_call.1} parent=87 // pred_fallthru
          _
      $region88: #{tpu_custom_call.1} parent=5 // pred_fallthru
        _
    $region6: #{tpu_custom_call.1} parent=1 // loop_footer
      %s33 = sadd.s32 1, %s29
    $region7: #{tpu_custom_call.1} parent=1 // loop_footer_branch
      %28 = sbr.rel target = $region3
    $region8: #{tpu_custom_call.1} parent=1 // loop_exit
      _
    %1681 = vsyncpa [#allocation3], 1
    %s1682 = scalar_lea.sflag [#allocation3], 1
    %1683 = vsyncpa %s1682, 1
    %1684 = vsyncpa [#allocation6], 1
    %s1685 = scalar_lea.sflag [#allocation6], 1
    %1686 = vsyncpa %s1685, 1
    %1687 = vsyncpa [#allocation9], 1
    %1688 = vsyncpa [#allocation12], 1
    %1689 = vsyncpa [#allocation4], 1
    %s1690 = scalar_lea.sflag [#allocation4], 1
    %1691 = vsyncpa %s1690, 1
    %1692 = vsyncpa [#allocation16], 1
    %s1693 = scalar_lea.sflag [#allocation16], 1
    %1694 = vsyncpa %s1693, 1

</llo_original>
